<compile_context>
chip_gen: v5e
topology: v5e:2x2
jax: 0.10.0
libtpu: 0.0.40
codegen_flags: <defaults>
</compile_context>

<pallas_src>
import functools
import math

import jax
import jax.numpy as jnp
from jax.experimental import pallas as pl
from jax.experimental.pallas import tpu as pltpu


def _layernorm(x, w, b, eps=1e-5):
    mu = jnp.mean(x, axis=-1, keepdims=True)
    var = jnp.mean((x - mu) ** 2, axis=-1, keepdims=True)
    return (x - mu) * jax.lax.rsqrt(var + eps) * w + b


def make_kernel(n_heads, dim, b_blk, seq):
    head_dim = dim // n_heads
    scale = 1.0 / math.sqrt(head_dim)
    rows = b_blk * seq

    def kernel(x_ref, bias_ref, keep_ref,
               wq_ref, bq_ref, wk_ref, bk_ref, wv_ref, bv_ref,
               wo_ref, bo_ref, ln1w_ref, ln1b_ref, ln2w_ref, ln2b_ref,
               w1_ref, b1_ref, w2_ref, b2_ref,
               o_ref, carry_ref):
        l = pl.program_id(1)

        @pl.when(l == 0)
        def _init():
            carry_ref[...] = x_ref[...]

        x = carry_ref[...]                       # (rows, dim) f32 carry
        xb = x.astype(jnp.bfloat16)

        # Additive key bias, broadcast ONCE per layer (not per head).
        bias = jnp.broadcast_to(bias_ref[...].reshape(b_blk, 1, seq),
                                (b_blk, seq, seq))

        # ---- multi-head self-attention ----
        # Big K=dim, N=dim projections; q scaled once right after projection.
        q = (jnp.dot(xb, wq_ref[0], preferred_element_type=jnp.float32)
             + bq_ref[0]) * scale
        k = jnp.dot(xb, wk_ref[0], preferred_element_type=jnp.float32) + bk_ref[0]
        v = jnp.dot(xb, wv_ref[0], preferred_element_type=jnp.float32) + bv_ref[0]

        ctx_heads = []
        for h in range(n_heads):
            sl = slice(h * head_dim, (h + 1) * head_dim)
            qh = q[:, sl].reshape(b_blk, seq, head_dim).astype(jnp.bfloat16)
            kh = k[:, sl].reshape(b_blk, seq, head_dim).astype(jnp.bfloat16)
            vh = v[:, sl].reshape(b_blk, seq, head_dim).astype(jnp.bfloat16)
            s = jnp.einsum('bqd,bkd->bqk', qh, kh,
                           preferred_element_type=jnp.float32)
            s = s + bias
            s = s - jnp.max(s, axis=-1, keepdims=True)
            p = jnp.exp(s)
            p = p * pl.reciprocal(jnp.sum(p, axis=-1, keepdims=True), approx=True)
            ctx = jnp.einsum('bqk,bkd->bqd', p.astype(jnp.bfloat16), vh,
                             preferred_element_type=jnp.float32)
            ctx_heads.append(ctx.reshape(rows, head_dim))

        # Lane-concatenate head contexts -> ONE (rows, dim) x (dim, dim) matmul.
        ctx_all = jnp.concatenate(ctx_heads, axis=-1).astype(jnp.bfloat16)
        attn = jnp.dot(ctx_all, wo_ref[0],
                       preferred_element_type=jnp.float32) + bo_ref[0]

        x = _layernorm(x + attn, ln1w_ref[0], ln1b_ref[0])

        # ---- feed-forward (relu) ----
        h1 = jnp.dot(x.astype(jnp.bfloat16), w1_ref[0],
                     preferred_element_type=jnp.float32) + b1_ref[0]
        h1 = jnp.maximum(h1, 0.0)
        ff = jnp.dot(h1.astype(jnp.bfloat16), w2_ref[0],
                     preferred_element_type=jnp.float32) + b2_ref[0]
        x = _layernorm(x + ff, ln2w_ref[0], ln2b_ref[0])

        carry_ref[...] = x

        @pl.when(l == pl.num_programs(1) - 1)
        def _store():
            # Lane-dense (rows, dim) store; final key-padding zero-out fused in.
            o_ref[...] = x * keep_ref[...]

    return kernel


def init_params(key, n_layers, dim, dim_ff):
    # PyTorch-convention shapes (out_features, in_features), stacked per layer.
    ks = jax.random.split(key, 6)
    std = 0.02
    wqkv = jax.random.normal(ks[0], (n_layers, 3 * dim, dim), jnp.float32) * std
    bqkv = jnp.zeros((n_layers, 3 * dim), jnp.float32)
    wo = jax.random.normal(ks[1], (n_layers, dim, dim), jnp.float32) * std
    bo = jnp.zeros((n_layers, dim), jnp.float32)
    ln1w = jnp.ones((n_layers, dim), jnp.float32)
    ln1b = jnp.zeros((n_layers, dim), jnp.float32)
    ln2w = jnp.ones((n_layers, dim), jnp.float32)
    ln2b = jnp.zeros((n_layers, dim), jnp.float32)
    w1 = jax.random.normal(ks[2], (n_layers, dim_ff, dim), jnp.float32) * std
    b1 = jnp.zeros((n_layers, dim_ff), jnp.float32)
    w2 = jax.random.normal(ks[3], (n_layers, dim, dim_ff), jnp.float32) * std
    b2 = jnp.zeros((n_layers, dim), jnp.float32)
    return (wqkv, bqkv, wo, bo, ln1w, ln1b, ln2w, ln2b, w1, b1, w2, b2)


@functools.partial(jax.jit, static_argnames=("n_heads",))
def seq_forward(x, mask, op_seq_mask, params, *, n_heads):
    batch, inst, seq, dim = x.shape
    n = batch * inst
    (wqkv, bqkv, wo, bo, ln1w, ln1b, ln2w, ln2b, w1, b1, w2, b2) = params
    n_layers = wqkv.shape[0]
    dim_ff = w1.shape[1]

    xf = x.reshape(n, seq, dim).astype(jnp.float32)
    m = mask.reshape(n, seq)
    om = op_seq_mask.reshape(n)

    # glue: x.masked_fill(op_seq_mask, 1) and the modified key-padding mask
    xf = jnp.where(om[:, None, None], jnp.float32(1.0), xf)
    mod_mask = jnp.logical_and(m, jnp.logical_not(om[:, None]))
    attn_bias = jnp.where(mod_mask, jnp.float32(-1e9), jnp.float32(0.0))  # (n, seq)
    keep = 1.0 - m.astype(jnp.float32)                                    # (n, seq)

    # ---- rows-per-block: target ~512 fused rows, bounded by a VMEM budget ----
    def vmem_bytes(bb):
        r = bb * seq
        wgt = 2 * (4 * dim * dim + 2 * dim * dim_ff) * 2        # dbl-buffered bf16 weights
        act = 2 * (2 * r * dim + bb * seq + r) * 4              # dbl-buffered x/out/bias/keep
        car = r * dim * 4                                       # f32 carry
        tmp = (r * dim_ff + bb * seq * seq + 4 * r * dim) * 4   # FFN + attn temporaries
        return wgt + act + car + tmp

    budget = 48 * 2 ** 20                    # conservative: leaves headroom on v7x (64 MiB)
    b_blk = max(1, 512 // seq)
    b_blk = -(-b_blk // 8) * 8               # multiple of 8 -> clean (8,128) sublane tiling
    while b_blk > 8 and vmem_bytes(b_blk) > budget:
        b_blk = max(8, (b_blk // 2) // 8 * 8)
    if b_blk >= n:
        b_blk = n                            # single block: block dims == full array dims
    num_blocks = -(-n // b_blk)
    n_pad = num_blocks * b_blk
    rows = b_blk * seq

    if n_pad != n:
        pad = n_pad - n
        xf = jnp.pad(xf, ((0, pad), (0, 0), (0, 0)), constant_values=1.0)
        attn_bias = jnp.pad(attn_bias, ((0, pad), (0, 0)))
        keep = jnp.pad(keep, ((0, pad), (0, 0)))

    x2d = xf.reshape(n_pad * seq, dim)          # flattened, lane-dense activations
    keep2d = keep.reshape(n_pad * seq, 1)

    # ---- pre-transpose / split weights; matmul operands in bf16 ----
    def t(w):  # (L, out, in) -> (L, in, out)
        return jnp.swapaxes(w, 1, 2)

    wq = t(wqkv[:, :dim, :]).astype(jnp.bfloat16)
    wk = t(wqkv[:, dim:2 * dim, :]).astype(jnp.bfloat16)
    wv = t(wqkv[:, 2 * dim:, :]).astype(jnp.bfloat16)
    bq = bqkv[:, :dim].reshape(n_layers, 1, dim)
    bk = bqkv[:, dim:2 * dim].reshape(n_layers, 1, dim)
    bv = bqkv[:, 2 * dim:].reshape(n_layers, 1, dim)
    wo_t = t(wo).astype(jnp.bfloat16)           # (L, dim, dim): single K=dim Wo matmul
    bo_r = bo.reshape(n_layers, 1, dim)
    w1_t = t(w1).astype(jnp.bfloat16)           # (L, dim, dim_ff)
    b1_r = b1.reshape(n_layers, 1, dim_ff)
    w2_t = t(w2).astype(jnp.bfloat16)           # (L, dim_ff, dim)
    b2_r = b2.reshape(n_layers, 1, dim)
    ln1w_r = ln1w.reshape(n_layers, 1, dim)
    ln1b_r = ln1b.reshape(n_layers, 1, dim)
    ln2w_r = ln2w.reshape(n_layers, 1, dim)
    ln2b_r = ln2b.reshape(n_layers, 1, dim)

    kernel = make_kernel(n_heads, dim, b_blk, seq)

    def per_layer(shape):
        nd = len(shape)
        return pl.BlockSpec((1,) + shape,
                            lambda i, l, _nd=nd: (l,) + (0,) * _nd)

    vmem_limit = int(min(max(vmem_bytes(b_blk) * 1.4, 32 * 2 ** 20), 64 * 2 ** 20))

    out = pl.pallas_call(
        kernel,
        out_shape=jax.ShapeDtypeStruct((n_pad * seq, dim), jnp.float32),
        grid=(num_blocks, n_layers),
        in_specs=[
            pl.BlockSpec((rows, dim), lambda i, l: (i, 0)),     # x (flattened rows)
            pl.BlockSpec((b_blk, seq), lambda i, l: (i, 0)),    # additive key bias
            pl.BlockSpec((rows, 1), lambda i, l: (i, 0)),       # output keep mask
            per_layer((dim, dim)),               # wq
            per_layer((1, dim)),                 # bq
            per_layer((dim, dim)),               # wk
            per_layer((1, dim)),                 # bk
            per_layer((dim, dim)),               # wv
            per_layer((1, dim)),                 # bv
            per_layer((dim, dim)),               # wo (full, single matmul)
            per_layer((1, dim)),                 # bo
            per_layer((1, dim)),                 # ln1w
            per_layer((1, dim)),                 # ln1b
            per_layer((1, dim)),                 # ln2w
            per_layer((1, dim)),                 # ln2b
            per_layer((dim, dim_ff)),            # w1
            per_layer((1, dim_ff)),              # b1
            per_layer((dim_ff, dim)),            # w2
            per_layer((1, dim)),                 # b2
        ],
        out_specs=pl.BlockSpec((rows, dim), lambda i, l: (i, 0)),
        scratch_shapes=[pltpu.VMEM((rows, dim), jnp.float32)],
        compiler_params=pltpu.CompilerParams(
            dimension_semantics=("parallel", "arbitrary"),
            vmem_limit_bytes=vmem_limit),
    )(x2d, attn_bias, keep2d,
      wq, bq, wk, bk, wv, bv, wo_t, bo_r,
      ln1w_r, ln1b_r, ln2w_r, ln2b_r, w1_t, b1_r, w2_t, b2_r)

    return out[:n * seq].reshape(batch, inst, seq, dim)


if __name__ == "__main__":
    # small shapes consistent with the module's forward
    batch, inst, seq = 2, 2, 8
    dim, dim_ff, n_heads, n_layers = 32, 64, 4, 2

    key = jax.random.PRNGKey(0)
    kx, km, ko, kp = jax.random.split(key, 4)

    x = jax.random.normal(kx, (batch, inst, seq, dim), jnp.float32)
    mask = jax.random.bernoulli(km, 0.3, (batch, inst, seq))          # True = pad
    op_seq_mask = jax.random.bernoulli(ko, 0.25, (batch, inst))       # True = whole seq masked

    params = init_params(kp, n_layers, dim, dim_ff)

    out = seq_forward(x, mask, op_seq_mask, params, n_heads=n_heads)
    out = jax.block_until_ready(out)

    assert out.shape == (batch, inst, seq, dim)
    assert not bool(jnp.any(jnp.isnan(out)))
    # TODO(synk): dropout layers are identity here (inference mode); training-mode
    # stochastic dropout is not implemented.
    print("KERNEL_OK")
</pallas_src>

<mosaic_0001>
module attributes {stable_mosaic.version = 11 : i64} {
  func.func @kernel(%arg0: i32, %arg1: i32, %arg2: memref<32x32xf32, #tpu.memory_space<vmem>>, %arg3: memref<4x8xf32, #tpu.memory_space<vmem>>, %arg4: memref<32x1xf32, #tpu.memory_space<vmem>>, %arg5: memref<1x32x32xbf16, #tpu.memory_space<vmem>>, %arg6: memref<1x1x32xf32, #tpu.memory_space<vmem>>, %arg7: memref<1x32x32xbf16, #tpu.memory_space<vmem>>, %arg8: memref<1x1x32xf32, #tpu.memory_space<vmem>>, %arg9: memref<1x32x32xbf16, #tpu.memory_space<vmem>>, %arg10: memref<1x1x32xf32, #tpu.memory_space<vmem>>, %arg11: memref<1x32x32xbf16, #tpu.memory_space<vmem>>, %arg12: memref<1x1x32xf32, #tpu.memory_space<vmem>>, %arg13: memref<1x1x32xf32, #tpu.memory_space<vmem>>, %arg14: memref<1x1x32xf32, #tpu.memory_space<vmem>>, %arg15: memref<1x1x32xf32, #tpu.memory_space<vmem>>, %arg16: memref<1x1x32xf32, #tpu.memory_space<vmem>>, %arg17: memref<1x32x64xbf16, #tpu.memory_space<vmem>>, %arg18: memref<1x1x64xf32, #tpu.memory_space<vmem>>, %arg19: memref<1x64x32xbf16, #tpu.memory_space<vmem>>, %arg20: memref<1x1x32xf32, #tpu.memory_space<vmem>>, %arg21: memref<32x32xf32, #tpu.memory_space<vmem>>, %arg22: memref<32x32xf32, #tpu.memory_space<vmem>>) attributes {dimension_semantics = [#tpu.dimension_semantics<parallel>, #tpu.dimension_semantics<arbitrary>], iteration_bounds = array<i64: 1, 2>, scalar_prefetch = 0 : i64, scratch_operands = 1 : i64, tpu.core_type = #tpu.core_type<tc>, window_params = [{transform_indices = @transform_0, window_bounds = array<i64: 32, 32>}, {transform_indices = @transform_1, window_bounds = array<i64: 4, 8>}, {transform_indices = @transform_2, window_bounds = array<i64: 32, 1>}, {transform_indices = @transform_3, window_bounds = array<i64: 1, 32, 32>}, {transform_indices = @transform_4, window_bounds = array<i64: 1, 1, 32>}, {transform_indices = @transform_5, window_bounds = array<i64: 1, 32, 32>}, {transform_indices = @transform_6, window_bounds = array<i64: 1, 1, 32>}, {transform_indices = @transform_7, window_bounds = array<i64: 1, 32, 32>}, {transform_indices = @transform_8, window_bounds = array<i64: 1, 1, 32>}, {transform_indices = @transform_9, window_bounds = array<i64: 1, 32, 32>}, {transform_indices = @transform_10, window_bounds = array<i64: 1, 1, 32>}, {transform_indices = @transform_11, window_bounds = array<i64: 1, 1, 32>}, {transform_indices = @transform_12, window_bounds = array<i64: 1, 1, 32>}, {transform_indices = @transform_13, window_bounds = array<i64: 1, 1, 32>}, {transform_indices = @transform_14, window_bounds = array<i64: 1, 1, 32>}, {transform_indices = @transform_15, window_bounds = array<i64: 1, 32, 64>}, {transform_indices = @transform_16, window_bounds = array<i64: 1, 1, 64>}, {transform_indices = @transform_17, window_bounds = array<i64: 1, 64, 32>}, {transform_indices = @transform_18, window_bounds = array<i64: 1, 1, 32>}, {transform_indices = @transform_19, window_bounds = array<i64: 32, 32>}]} {
    %c0_i32 = arith.constant 0 : i32
    %0 = arith.cmpi eq, %arg1, %c0_i32 : i32
    %1 = arith.extui %0 : i1 to i32
    %c0_i32_0 = arith.constant 0 : i32
    %2 = arith.cmpi ne, %1, %c0_i32_0 : i32
    scf.if %2 {
      %c0_88 = arith.constant 0 : index
      %c0_89 = arith.constant 0 : index
      %213 = vector.load %arg2[%c0_88, %c0_89] : memref<32x32xf32, #tpu.memory_space<vmem>>, vector<32x32xf32>
      %c0_90 = arith.constant 0 : index
      %c0_91 = arith.constant 0 : index
      %214 = vector.load %arg22[%c0_90, %c0_91] : memref<32x32xf32, #tpu.memory_space<vmem>>, vector<32x32xf32>
      tpu.vector_store %arg22[%c0_90, %c0_91], %213 {strides = array<i32>} : memref<32x32xf32, #tpu.memory_space<vmem>>, vector<32x32xf32>,
    } else {
    }
    %c0 = arith.constant 0 : index
    %c0_1 = arith.constant 0 : index
    %3 = vector.load %arg22[%c0, %c0_1] : memref<32x32xf32, #tpu.memory_space<vmem>>, vector<32x32xf32>
    %4 = arith.truncf %3 : vector<32x32xf32> to vector<32x32xbf16>
    %c0_2 = arith.constant 0 : index
    %c0_3 = arith.constant 0 : index
    %5 = vector.load %arg3[%c0_2, %c0_3] : memref<4x8xf32, #tpu.memory_space<vmem>>, vector<4x8xf32>
    %6 = vector.shape_cast %5 : vector<4x8xf32> to vector<4x1x8xf32>
    %7 = vector.shape_cast %6 : vector<4x1x8xf32> to vector<4x1x8xf32>
    %8 = vector.broadcast %7 : vector<4x1x8xf32> to vector<4x8x8xf32>
    %c0_4 = arith.constant 0 : index
    %c0_5 = arith.constant 0 : index
    %c0_6 = arith.constant 0 : index
    %9 = vector.load %arg5[%c0_4, %c0_5, %c0_6] : memref<1x32x32xbf16, #tpu.memory_space<vmem>>, vector<1x32x32xbf16>
    %10 = vector.shape_cast %9 : vector<1x32x32xbf16> to vector<32x32xbf16>
    %cst = arith.constant dense<0.000000e+00> : vector<32x32xf32>
    %11 = tpu.matmul %4, %10, %cst {dimension_numbers = #tpu.dot_dimension_numbers<[1], [0], [0], [1], [0, 0, 1, 1], [], []>} : vector<32x32xbf16>, vector<32x32xbf16>, vector<32x32xf32> -> vector<32x32xf32>
    %c0_7 = arith.constant 0 : index
    %c0_8 = arith.constant 0 : index
    %c0_9 = arith.constant 0 : index
    %12 = vector.load %arg6[%c0_7, %c0_8, %c0_9] : memref<1x1x32xf32, #tpu.memory_space<vmem>>, vector<1x1x32xf32>
    %13 = vector.shape_cast %12 : vector<1x1x32xf32> to vector<1x32xf32>
    %14 = vector.broadcast %13 : vector<1x32xf32> to vector<32x32xf32>
    %15 = arith.addf %11, %14 : vector<32x32xf32>
    %cst_10 = arith.constant 0.353553385 : f32
    %16 = vector.broadcast %cst_10 : f32 to vector<32x32xf32>
    %17 = arith.mulf %15, %16 : vector<32x32xf32>
    %c0_11 = arith.constant 0 : index
    %c0_12 = arith.constant 0 : index
    %c0_13 = arith.constant 0 : index
    %18 = vector.load %arg7[%c0_11, %c0_12, %c0_13] : memref<1x32x32xbf16, #tpu.memory_space<vmem>>, vector<1x32x32xbf16>
    %19 = vector.shape_cast %18 : vector<1x32x32xbf16> to vector<32x32xbf16>
    %cst_14 = arith.constant dense<0.000000e+00> : vector<32x32xf32>
    %20 = tpu.matmul %4, %19, %cst_14 {dimension_numbers = #tpu.dot_dimension_numbers<[1], [0], [0], [1], [0, 0, 1, 1], [], []>} : vector<32x32xbf16>, vector<32x32xbf16>, vector<32x32xf32> -> vector<32x32xf32>
    %c0_15 = arith.constant 0 : index
    %c0_16 = arith.constant 0 : index
    %c0_17 = arith.constant 0 : index
    %21 = vector.load %arg8[%c0_15, %c0_16, %c0_17] : memref<1x1x32xf32, #tpu.memory_space<vmem>>, vector<1x1x32xf32>
    %22 = vector.shape_cast %21 : vector<1x1x32xf32> to vector<1x32xf32>
    %23 = vector.broadcast %22 : vector<1x32xf32> to vector<32x32xf32>
    %24 = arith.addf %20, %23 : vector<32x32xf32>
    %c0_18 = arith.constant 0 : index
    %c0_19 = arith.constant 0 : index
    %c0_20 = arith.constant 0 : index
    %25 = vector.load %arg9[%c0_18, %c0_19, %c0_20] : memref<1x32x32xbf16, #tpu.memory_space<vmem>>, vector<1x32x32xbf16>
    %26 = vector.shape_cast %25 : vector<1x32x32xbf16> to vector<32x32xbf16>
    %cst_21 = arith.constant dense<0.000000e+00> : vector<32x32xf32>
    %27 = tpu.matmul %4, %26, %cst_21 {dimension_numbers = #tpu.dot_dimension_numbers<[1], [0], [0], [1], [0, 0, 1, 1], [], []>} : vector<32x32xbf16>, vector<32x32xbf16>, vector<32x32xf32> -> vector<32x32xf32>
    %c0_22 = arith.constant 0 : index
    %c0_23 = arith.constant 0 : index
    %c0_24 = arith.constant 0 : index
    %28 = vector.load %arg10[%c0_22, %c0_23, %c0_24] : memref<1x1x32xf32, #tpu.memory_space<vmem>>, vector<1x1x32xf32>
    %29 = vector.shape_cast %28 : vector<1x1x32xf32> to vector<1x32xf32>
    %30 = vector.broadcast %29 : vector<1x32xf32> to vector<32x32xf32>
    %31 = arith.addf %27, %30 : vector<32x32xf32>
    %32 = vector.extract_strided_slice %17 {offsets = [0, 0], sizes = [32, 8], strides = [1, 1]} : vector<32x32xf32> to vector<32x8xf32>
    %33 = vector.shape_cast %32 : vector<32x8xf32> to vector<4x8x8xf32>
    %34 = arith.truncf %33 : vector<4x8x8xf32> to vector<4x8x8xbf16>
    %35 = vector.extract_strided_slice %24 {offsets = [0, 0], sizes = [32, 8], strides = [1, 1]} : vector<32x32xf32> to vector<32x8xf32>
    %36 = vector.shape_cast %35 : vector<32x8xf32> to vector<4x8x8xf32>
    %37 = arith.truncf %36 : vector<4x8x8xf32> to vector<4x8x8xbf16>
    %38 = vector.extract_strided_slice %31 {offsets = [0, 0], sizes = [32, 8], strides = [1, 1]} : vector<32x32xf32> to vector<32x8xf32>
    %39 = vector.shape_cast %38 : vector<32x8xf32> to vector<4x8x8xf32>
    %40 = arith.truncf %39 : vector<4x8x8xf32> to vector<4x8x8xbf16>
    "tpu.trace_start"() <{level = 10 : i32, message = "bqd,bkd->bqk"}> : () -> ()
    %cst_25 = arith.constant dense<0.000000e+00> : vector<4x8x8xf32>
    %41 = tpu.matmul %34, %37, %cst_25 {dimension_numbers = #tpu.dot_dimension_numbers<[2], [2], [1], [1], [0, 0, 0, 1, 1, 1], [0], [0]>} : vector<4x8x8xbf16>, vector<4x8x8xbf16>, vector<4x8x8xf32> -> vector<4x8x8xf32>
    "tpu.trace_stop"() : () -> ()
    %42 = arith.addf %41, %8 : vector<4x8x8xf32>
    %cst_26 = arith.constant dense<0xFF800000> : vector<4x8xf32>
    %43 = vector.multi_reduction <maximumf>, %42, %cst_26 [2] : vector<4x8x8xf32> to vector<4x8xf32>
    %44 = vector.shape_cast %43 : vector<4x8xf32> to vector<4x8x1xf32>
    %45 = vector.broadcast %44 : vector<4x8x1xf32> to vector<4x8x8xf32>
    %46 = arith.subf %42, %45 : vector<4x8x8xf32>
    %47 = math.exp %46 : vector<4x8x8xf32>
    %cst_27 = arith.constant dense<0.000000e+00> : vector<4x8xf32>
    %48 = vector.multi_reduction <add>, %47, %cst_27 [2] : vector<4x8x8xf32> to vector<4x8xf32>
    %49 = vector.shape_cast %48 : vector<4x8xf32> to vector<4x8x1xf32>
    %50 = tpu.reciprocal %49 {approx = true} : vector<4x8x1xf32> -> vector<4x8x1xf32>
    %51 = vector.broadcast %50 : vector<4x8x1xf32> to vector<4x8x8xf32>
    %52 = arith.mulf %47, %51 : vector<4x8x8xf32>
    %53 = arith.truncf %52 : vector<4x8x8xf32> to vector<4x8x8xbf16>
    "tpu.trace_start"() <{level = 10 : i32, message = "bqk,bkd->bqd"}> : () -> ()
    %cst_28 = arith.constant dense<0.000000e+00> : vector<4x8x8xf32>
    %54 = tpu.matmul %53, %40, %cst_28 {dimension_numbers = #tpu.dot_dimension_numbers<[2], [1], [1], [2], [0, 0, 0, 1, 1, 2], [0], [0]>} : vector<4x8x8xbf16>, vector<4x8x8xbf16>, vector<4x8x8xf32> -> vector<4x8x8xf32>
    "tpu.trace_stop"() : () -> ()
    %55 = vector.shape_cast %54 : vector<4x8x8xf32> to vector<32x8xf32>
    %56 = vector.extract_strided_slice %17 {offsets = [0, 8], sizes = [32, 8], strides = [1, 1]} : vector<32x32xf32> to vector<32x8xf32>
    %57 = vector.shape_cast %56 : vector<32x8xf32> to vector<4x8x8xf32>
    %58 = arith.truncf %57 : vector<4x8x8xf32> to vector<4x8x8xbf16>
    %59 = vector.extract_strided_slice %24 {offsets = [0, 8], sizes = [32, 8], strides = [1, 1]} : vector<32x32xf32> to vector<32x8xf32>
    %60 = vector.shape_cast %59 : vector<32x8xf32> to vector<4x8x8xf32>
    %61 = arith.truncf %60 : vector<4x8x8xf32> to vector<4x8x8xbf16>
    %62 = vector.extract_strided_slice %31 {offsets = [0, 8], sizes = [32, 8], strides = [1, 1]} : vector<32x32xf32> to vector<32x8xf32>
    %63 = vector.shape_cast %62 : vector<32x8xf32> to vector<4x8x8xf32>
    %64 = arith.truncf %63 : vector<4x8x8xf32> to vector<4x8x8xbf16>
    "tpu.trace_start"() <{level = 10 : i32, message = "bqd,bkd->bqk"}> : () -> ()
    %cst_29 = arith.constant dense<0.000000e+00> : vector<4x8x8xf32>
    %65 = tpu.matmul %58, %61, %cst_29 {dimension_numbers = #tpu.dot_dimension_numbers<[2], [2], [1], [1], [0, 0, 0, 1, 1, 1], [0], [0]>} : vector<4x8x8xbf16>, vector<4x8x8xbf16>, vector<4x8x8xf32> -> vector<4x8x8xf32>
    "tpu.trace_stop"() : () -> ()
    %66 = arith.addf %65, %8 : vector<4x8x8xf32>
    %cst_30 = arith.constant dense<0xFF800000> : vector<4x8xf32>
    %67 = vector.multi_reduction <maximumf>, %66, %cst_30 [2] : vector<4x8x8xf32> to vector<4x8xf32>
    %68 = vector.shape_cast %67 : vector<4x8xf32> to vector<4x8x1xf32>
    %69 = vector.broadcast %68 : vector<4x8x1xf32> to vector<4x8x8xf32>
    %70 = arith.subf %66, %69 : vector<4x8x8xf32>
    %71 = math.exp %70 : vector<4x8x8xf32>
    %cst_31 = arith.constant dense<0.000000e+00> : vector<4x8xf32>
    %72 = vector.multi_reduction <add>, %71, %cst_31 [2] : vector<4x8x8xf32> to vector<4x8xf32>
    %73 = vector.shape_cast %72 : vector<4x8xf32> to vector<4x8x1xf32>
    %74 = tpu.reciprocal %73 {approx = true} : vector<4x8x1xf32> -> vector<4x8x1xf32>
    %75 = vector.broadcast %74 : vector<4x8x1xf32> to vector<4x8x8xf32>
    %76 = arith.mulf %71, %75 : vector<4x8x8xf32>
    %77 = arith.truncf %76 : vector<4x8x8xf32> to vector<4x8x8xbf16>
    "tpu.trace_start"() <{level = 10 : i32, message = "bqk,bkd->bqd"}> : () -> ()
    %cst_32 = arith.constant dense<0.000000e+00> : vector<4x8x8xf32>
    %78 = tpu.matmul %77, %64, %cst_32 {dimension_numbers = #tpu.dot_dimension_numbers<[2], [1], [1], [2], [0, 0, 0, 1, 1, 2], [0], [0]>} : vector<4x8x8xbf16>, vector<4x8x8xbf16>, vector<4x8x8xf32> -> vector<4x8x8xf32>
    "tpu.trace_stop"() : () -> ()
    %79 = vector.shape_cast %78 : vector<4x8x8xf32> to vector<32x8xf32>
    %80 = vector.extract_strided_slice %17 {offsets = [0, 16], sizes = [32, 8], strides = [1, 1]} : vector<32x32xf32> to vector<32x8xf32>
    %81 = vector.shape_cast %80 : vector<32x8xf32> to vector<4x8x8xf32>
    %82 = arith.truncf %81 : vector<4x8x8xf32> to vector<4x8x8xbf16>
    %83 = vector.extract_strided_slice %24 {offsets = [0, 16], sizes = [32, 8], strides = [1, 1]} : vector<32x32xf32> to vector<32x8xf32>
    %84 = vector.shape_cast %83 : vector<32x8xf32> to vector<4x8x8xf32>
    %85 = arith.truncf %84 : vector<4x8x8xf32> to vector<4x8x8xbf16>
    %86 = vector.extract_strided_slice %31 {offsets = [0, 16], sizes = [32, 8], strides = [1, 1]} : vector<32x32xf32> to vector<32x8xf32>
    %87 = vector.shape_cast %86 : vector<32x8xf32> to vector<4x8x8xf32>
    %88 = arith.truncf %87 : vector<4x8x8xf32> to vector<4x8x8xbf16>
    "tpu.trace_start"() <{level = 10 : i32, message = "bqd,bkd->bqk"}> : () -> ()
    %cst_33 = arith.constant dense<0.000000e+00> : vector<4x8x8xf32>
    %89 = tpu.matmul %82, %85, %cst_33 {dimension_numbers = #tpu.dot_dimension_numbers<[2], [2], [1], [1], [0, 0, 0, 1, 1, 1], [0], [0]>} : vector<4x8x8xbf16>, vector<4x8x8xbf16>, vector<4x8x8xf32> -> vector<4x8x8xf32>
    "tpu.trace_stop"() : () -> ()
    %90 = arith.addf %89, %8 : vector<4x8x8xf32>
    %cst_34 = arith.constant dense<0xFF800000> : vector<4x8xf32>
    %91 = vector.multi_reduction <maximumf>, %90, %cst_34 [2] : vector<4x8x8xf32> to vector<4x8xf32>
    %92 = vector.shape_cast %91 : vector<4x8xf32> to vector<4x8x1xf32>
    %93 = vector.broadcast %92 : vector<4x8x1xf32> to vector<4x8x8xf32>
    %94 = arith.subf %90, %93 : vector<4x8x8xf32>
    %95 = math.exp %94 : vector<4x8x8xf32>
    %cst_35 = arith.constant dense<0.000000e+00> : vector<4x8xf32>
    %96 = vector.multi_reduction <add>, %95, %cst_35 [2] : vector<4x8x8xf32> to vector<4x8xf32>
    %97 = vector.shape_cast %96 : vector<4x8xf32> to vector<4x8x1xf32>
    %98 = tpu.reciprocal %97 {approx = true} : vector<4x8x1xf32> -> vector<4x8x1xf32>
    %99 = vector.broadcast %98 : vector<4x8x1xf32> to vector<4x8x8xf32>
    %100 = arith.mulf %95, %99 : vector<4x8x8xf32>
    %101 = arith.truncf %100 : vector<4x8x8xf32> to vector<4x8x8xbf16>
    "tpu.trace_start"() <{level = 10 : i32, message = "bqk,bkd->bqd"}> : () -> ()
    %cst_36 = arith.constant dense<0.000000e+00> : vector<4x8x8xf32>
    %102 = tpu.matmul %101, %88, %cst_36 {dimension_numbers = #tpu.dot_dimension_numbers<[2], [1], [1], [2], [0, 0, 0, 1, 1, 2], [0], [0]>} : vector<4x8x8xbf16>, vector<4x8x8xbf16>, vector<4x8x8xf32> -> vector<4x8x8xf32>
    "tpu.trace_stop"() : () -> ()
    %103 = vector.shape_cast %102 : vector<4x8x8xf32> to vector<32x8xf32>
    %104 = vector.extract_strided_slice %17 {offsets = [0, 24], sizes = [32, 8], strides = [1, 1]} : vector<32x32xf32> to vector<32x8xf32>
    %105 = vector.shape_cast %104 : vector<32x8xf32> to vector<4x8x8xf32>
    %106 = arith.truncf %105 : vector<4x8x8xf32> to vector<4x8x8xbf16>
    %107 = vector.extract_strided_slice %24 {offsets = [0, 24], sizes = [32, 8], strides = [1, 1]} : vector<32x32xf32> to vector<32x8xf32>
    %108 = vector.shape_cast %107 : vector<32x8xf32> to vector<4x8x8xf32>
    %109 = arith.truncf %108 : vector<4x8x8xf32> to vector<4x8x8xbf16>
    %110 = vector.extract_strided_slice %31 {offsets = [0, 24], sizes = [32, 8], strides = [1, 1]} : vector<32x32xf32> to vector<32x8xf32>
    %111 = vector.shape_cast %110 : vector<32x8xf32> to vector<4x8x8xf32>
    %112 = arith.truncf %111 : vector<4x8x8xf32> to vector<4x8x8xbf16>
    "tpu.trace_start"() <{level = 10 : i32, message = "bqd,bkd->bqk"}> : () -> ()
    %cst_37 = arith.constant dense<0.000000e+00> : vector<4x8x8xf32>
    %113 = tpu.matmul %106, %109, %cst_37 {dimension_numbers = #tpu.dot_dimension_numbers<[2], [2], [1], [1], [0, 0, 0, 1, 1, 1], [0], [0]>} : vector<4x8x8xbf16>, vector<4x8x8xbf16>, vector<4x8x8xf32> -> vector<4x8x8xf32>
    "tpu.trace_stop"() : () -> ()
    %114 = arith.addf %113, %8 : vector<4x8x8xf32>
    %cst_38 = arith.constant dense<0xFF800000> : vector<4x8xf32>
    %115 = vector.multi_reduction <maximumf>, %114, %cst_38 [2] : vector<4x8x8xf32> to vector<4x8xf32>
    %116 = vector.shape_cast %115 : vector<4x8xf32> to vector<4x8x1xf32>
    %117 = vector.broadcast %116 : vector<4x8x1xf32> to vector<4x8x8xf32>
    %118 = arith.subf %114, %117 : vector<4x8x8xf32>
    %119 = math.exp %118 : vector<4x8x8xf32>
    %cst_39 = arith.constant dense<0.000000e+00> : vector<4x8xf32>
    %120 = vector.multi_reduction <add>, %119, %cst_39 [2] : vector<4x8x8xf32> to vector<4x8xf32>
    %121 = vector.shape_cast %120 : vector<4x8xf32> to vector<4x8x1xf32>
    %122 = tpu.reciprocal %121 {approx = true} : vector<4x8x1xf32> -> vector<4x8x1xf32>
    %123 = vector.broadcast %122 : vector<4x8x1xf32> to vector<4x8x8xf32>
    %124 = arith.mulf %119, %123 : vector<4x8x8xf32>
    %125 = arith.truncf %124 : vector<4x8x8xf32> to vector<4x8x8xbf16>
    "tpu.trace_start"() <{level = 10 : i32, message = "bqk,bkd->bqd"}> : () -> ()
    %cst_40 = arith.constant dense<0.000000e+00> : vector<4x8x8xf32>
    %126 = tpu.matmul %125, %112, %cst_40 {dimension_numbers = #tpu.dot_dimension_numbers<[2], [1], [1], [2], [0, 0, 0, 1, 1, 2], [0], [0]>} : vector<4x8x8xbf16>, vector<4x8x8xbf16>, vector<4x8x8xf32> -> vector<4x8x8xf32>
    "tpu.trace_stop"() : () -> ()
    %127 = vector.shape_cast %126 : vector<4x8x8xf32> to vector<32x8xf32>
    %128 = tpu.concatenate %55, %79, %103, %127 in 1 : vector<32x8xf32>, vector<32x8xf32>, vector<32x8xf32>, vector<32x8xf32> -> vector<32x32xf32>
    %129 = arith.truncf %128 : vector<32x32xf32> to vector<32x32xbf16>
    %c0_41 = arith.constant 0 : index
    %c0_42 = arith.constant 0 : index
    %c0_43 = arith.constant 0 : index
    %130 = vector.load %arg11[%c0_41, %c0_42, %c0_43] : memref<1x32x32xbf16, #tpu.memory_space<vmem>>, vector<1x32x32xbf16>
    %131 = vector.shape_cast %130 : vector<1x32x32xbf16> to vector<32x32xbf16>
    %cst_44 = arith.constant dense<0.000000e+00> : vector<32x32xf32>
    %132 = tpu.matmul %129, %131, %cst_44 {dimension_numbers = #tpu.dot_dimension_numbers<[1], [0], [0], [1], [0, 0, 1, 1], [], []>} : vector<32x32xbf16>, vector<32x32xbf16>, vector<32x32xf32> -> vector<32x32xf32>
    %c0_45 = arith.constant 0 : index
    %c0_46 = arith.constant 0 : index
    %c0_47 = arith.constant 0 : index
    %133 = vector.load %arg12[%c0_45, %c0_46, %c0_47] : memref<1x1x32xf32, #tpu.memory_space<vmem>>, vector<1x1x32xf32>
    %134 = vector.shape_cast %133 : vector<1x1x32xf32> to vector<1x32xf32>
    %135 = vector.broadcast %134 : vector<1x32xf32> to vector<32x32xf32>
    %136 = arith.addf %132, %135 : vector<32x32xf32>
    %137 = arith.addf %3, %136 : vector<32x32xf32>
    %c0_48 = arith.constant 0 : index
    %c0_49 = arith.constant 0 : index
    %c0_50 = arith.constant 0 : index
    %138 = vector.load %arg13[%c0_48, %c0_49, %c0_50] : memref<1x1x32xf32, #tpu.memory_space<vmem>>, vector<1x1x32xf32>
    %139 = vector.shape_cast %138 : vector<1x1x32xf32> to vector<1x32xf32>
    %c0_51 = arith.constant 0 : index
    %c0_52 = arith.constant 0 : index
    %c0_53 = arith.constant 0 : index
    %140 = vector.load %arg14[%c0_51, %c0_52, %c0_53] : memref<1x1x32xf32, #tpu.memory_space<vmem>>, vector<1x1x32xf32>
    %141 = vector.shape_cast %140 : vector<1x1x32xf32> to vector<1x32xf32>
    %cst_54 = arith.constant dense<0.000000e+00> : vector<32xf32>
    %142 = vector.multi_reduction <add>, %137, %cst_54 [1] : vector<32x32xf32> to vector<32xf32>
    %143 = vector.shape_cast %142 : vector<32xf32> to vector<32x1xf32>
    %cst_55 = arith.constant 3.200000e+01 : f32
    %144 = vector.broadcast %cst_55 : f32 to vector<32x1xf32>
    %145 = arith.divf %143, %144 : vector<32x1xf32>
    %146 = vector.broadcast %145 : vector<32x1xf32> to vector<32x32xf32>
    %147 = arith.subf %137, %146 : vector<32x32xf32>
    %148 = arith.mulf %147, %147 : vector<32x32xf32>
    %cst_56 = arith.constant dense<0.000000e+00> : vector<32xf32>
    %149 = vector.multi_reduction <add>, %148, %cst_56 [1] : vector<32x32xf32> to vector<32xf32>
    %150 = vector.shape_cast %149 : vector<32xf32> to vector<32x1xf32>
    %cst_57 = arith.constant 3.200000e+01 : f32
    %151 = vector.broadcast %cst_57 : f32 to vector<32x1xf32>
    %152 = arith.divf %150, %151 : vector<32x1xf32>
    %153 = vector.broadcast %145 : vector<32x1xf32> to vector<32x32xf32>
    %154 = arith.subf %137, %153 : vector<32x32xf32>
    %cst_58 = arith.constant 9.99999974E-6 : f32
    %155 = vector.broadcast %cst_58 : f32 to vector<32x1xf32>
    %156 = arith.addf %152, %155 : vector<32x1xf32>
    %157 = math.rsqrt %156 : vector<32x1xf32>
    %158 = vector.broadcast %157 : vector<32x1xf32> to vector<32x32xf32>
    %159 = arith.mulf %154, %158 : vector<32x32xf32>
    %160 = vector.broadcast %139 : vector<1x32xf32> to vector<32x32xf32>
    %161 = arith.mulf %159, %160 : vector<32x32xf32>
    %162 = vector.broadcast %141 : vector<1x32xf32> to vector<32x32xf32>
    %163 = arith.addf %161, %162 : vector<32x32xf32>
    %164 = arith.truncf %163 : vector<32x32xf32> to vector<32x32xbf16>
    %c0_59 = arith.constant 0 : index
    %c0_60 = arith.constant 0 : index
    %c0_61 = arith.constant 0 : index
    %165 = vector.load %arg17[%c0_59, %c0_60, %c0_61] : memref<1x32x64xbf16, #tpu.memory_space<vmem>>, vector<1x32x64xbf16>
    %166 = vector.shape_cast %165 : vector<1x32x64xbf16> to vector<32x64xbf16>
    %cst_62 = arith.constant dense<0.000000e+00> : vector<32x64xf32>
    %167 = tpu.matmul %164, %166, %cst_62 {dimension_numbers = #tpu.dot_dimension_numbers<[1], [0], [0], [1], [0, 0, 1, 1], [], []>} : vector<32x32xbf16>, vector<32x64xbf16>, vector<32x64xf32> -> vector<32x64xf32>
    %c0_63 = arith.constant 0 : index
    %c0_64 = arith.constant 0 : index
    %c0_65 = arith.constant 0 : index
    %168 = vector.load %arg18[%c0_63, %c0_64, %c0_65] : memref<1x1x64xf32, #tpu.memory_space<vmem>>, vector<1x1x64xf32>
    %169 = vector.shape_cast %168 : vector<1x1x64xf32> to vector<1x64xf32>
    %170 = vector.broadcast %169 : vector<1x64xf32> to vector<32x64xf32>
    %171 = arith.addf %167, %170 : vector<32x64xf32>
    %cst_66 = arith.constant 0.000000e+00 : f32
    %172 = vector.broadcast %cst_66 : f32 to vector<32x64xf32>
    %173 = arith.maximumf %171, %172 : vector<32x64xf32>
    %174 = arith.truncf %173 : vector<32x64xf32> to vector<32x64xbf16>
    %c0_67 = arith.constant 0 : index
    %c0_68 = arith.constant 0 : index
    %c0_69 = arith.constant 0 : index
    %175 = vector.load %arg19[%c0_67, %c0_68, %c0_69] : memref<1x64x32xbf16, #tpu.memory_space<vmem>>, vector<1x64x32xbf16>
    %176 = vector.shape_cast %175 : vector<1x64x32xbf16> to vector<64x32xbf16>
    %cst_70 = arith.constant dense<0.000000e+00> : vector<32x32xf32>
    %177 = tpu.matmul %174, %176, %cst_70 {dimension_numbers = #tpu.dot_dimension_numbers<[1], [0], [0], [1], [0, 0, 1, 1], [], []>} : vector<32x64xbf16>, vector<64x32xbf16>, vector<32x32xf32> -> vector<32x32xf32>
    %c0_71 = arith.constant 0 : index
    %c0_72 = arith.constant 0 : index
    %c0_73 = arith.constant 0 : index
    %178 = vector.load %arg20[%c0_71, %c0_72, %c0_73] : memref<1x1x32xf32, #tpu.memory_space<vmem>>, vector<1x1x32xf32>
    %179 = vector.shape_cast %178 : vector<1x1x32xf32> to vector<1x32xf32>
    %180 = vector.broadcast %179 : vector<1x32xf32> to vector<32x32xf32>
    %181 = arith.addf %177, %180 : vector<32x32xf32>
    %182 = arith.addf %163, %181 : vector<32x32xf32>
    %c0_74 = arith.constant 0 : index
    %c0_75 = arith.constant 0 : index
    %c0_76 = arith.constant 0 : index
    %183 = vector.load %arg15[%c0_74, %c0_75, %c0_76] : memref<1x1x32xf32, #tpu.memory_space<vmem>>, vector<1x1x32xf32>
    %184 = vector.shape_cast %183 : vector<1x1x32xf32> to vector<1x32xf32>
    %c0_77 = arith.constant 0 : index
    %c0_78 = arith.constant 0 : index
    %c0_79 = arith.constant 0 : index
    %185 = vector.load %arg16[%c0_77, %c0_78, %c0_79] : memref<1x1x32xf32, #tpu.memory_space<vmem>>, vector<1x1x32xf32>
    %186 = vector.shape_cast %185 : vector<1x1x32xf32> to vector<1x32xf32>
    %cst_80 = arith.constant dense<0.000000e+00> : vector<32xf32>
    %187 = vector.multi_reduction <add>, %182, %cst_80 [1] : vector<32x32xf32> to vector<32xf32>
    %188 = vector.shape_cast %187 : vector<32xf32> to vector<32x1xf32>
    %cst_81 = arith.constant 3.200000e+01 : f32
    %189 = vector.broadcast %cst_81 : f32 to vector<32x1xf32>
    %190 = arith.divf %188, %189 : vector<32x1xf32>
    %191 = vector.broadcast %190 : vector<32x1xf32> to vector<32x32xf32>
    %192 = arith.subf %182, %191 : vector<32x32xf32>
    %193 = arith.mulf %192, %192 : vector<32x32xf32>
    %cst_82 = arith.constant dense<0.000000e+00> : vector<32xf32>
    %194 = vector.multi_reduction <add>, %193, %cst_82 [1] : vector<32x32xf32> to vector<32xf32>
    %195 = vector.shape_cast %194 : vector<32xf32> to vector<32x1xf32>
    %cst_83 = arith.constant 3.200000e+01 : f32
    %196 = vector.broadcast %cst_83 : f32 to vector<32x1xf32>
    %197 = arith.divf %195, %196 : vector<32x1xf32>
    %198 = vector.broadcast %190 : vector<32x1xf32> to vector<32x32xf32>
    %199 = arith.subf %182, %198 : vector<32x32xf32>
    %cst_84 = arith.constant 9.99999974E-6 : f32
    %200 = vector.broadcast %cst_84 : f32 to vector<32x1xf32>
    %201 = arith.addf %197, %200 : vector<32x1xf32>
    %202 = math.rsqrt %201 : vector<32x1xf32>
    %203 = vector.broadcast %202 : vector<32x1xf32> to vector<32x32xf32>
    %204 = arith.mulf %199, %203 : vector<32x32xf32>
    %205 = vector.broadcast %184 : vector<1x32xf32> to vector<32x32xf32>
    %206 = arith.mulf %204, %205 : vector<32x32xf32>
    %207 = vector.broadcast %186 : vector<1x32xf32> to vector<32x32xf32>
    %208 = arith.addf %206, %207 : vector<32x32xf32>
    %c0_85 = arith.constant 0 : index
    %c0_86 = arith.constant 0 : index
    %209 = vector.load %arg22[%c0_85, %c0_86] : memref<32x32xf32, #tpu.memory_space<vmem>>, vector<32x32xf32>
    tpu.vector_store %arg22[%c0_85, %c0_86], %208 {strides = array<i32>} : memref<32x32xf32, #tpu.memory_space<vmem>>, vector<32x32xf32>,
    %c1_i32 = arith.constant 1 : i32
    %210 = arith.cmpi eq, %arg1, %c1_i32 : i32
    %211 = arith.extui %210 : i1 to i32
    %c0_i32_87 = arith.constant 0 : i32
    %212 = arith.cmpi ne, %211, %c0_i32_87 : i32
    scf.if %212 {
      %c0_88 = arith.constant 0 : index
      %c0_89 = arith.constant 0 : index
      %213 = vector.load %arg4[%c0_88, %c0_89] : memref<32x1xf32, #tpu.memory_space<vmem>>, vector<32x1xf32>
      %214 = vector.broadcast %213 : vector<32x1xf32> to vector<32x32xf32>
      %215 = arith.mulf %208, %214 : vector<32x32xf32>
      %c0_90 = arith.constant 0 : index
      %c0_91 = arith.constant 0 : index
      %216 = vector.load %arg21[%c0_90, %c0_91] : memref<32x32xf32, #tpu.memory_space<vmem>>, vector<32x32xf32>
      tpu.vector_store %arg21[%c0_90, %c0_91], %215 {strides = array<i32>} : memref<32x32xf32, #tpu.memory_space<vmem>>, vector<32x32xf32>,
    } else {
    }
    return
  }
  func.func @transform_0(%arg0: i32, %arg1: i32) -> (i32, i32) {
    %c0_i32 = arith.constant 0 : i32
    %c0_i32_0 = arith.constant 0 : i32
    return %arg0, %c0_i32 : i32, i32
  }
  func.func @transform_1(%arg0: i32, %arg1: i32) -> (i32, i32) {
    %c0_i32 = arith.constant 0 : i32
    %c0_i32_0 = arith.constant 0 : i32
    return %arg0, %c0_i32 : i32, i32
  }
  func.func @transform_2(%arg0: i32, %arg1: i32) -> (i32, i32) {
    %c0_i32 = arith.constant 0 : i32
    %c0_i32_0 = arith.constant 0 : i32
    return %arg0, %c0_i32 : i32, i32
  }
  func.func @transform_3(%arg0: i32, %arg1: i32) -> (i32, i32, i32) {
    %c0_i32 = arith.constant 0 : i32
    %c0_i32_0 = arith.constant 0 : i32
    %c0_i32_1 = arith.constant 0 : i32
    return %arg1, %c0_i32, %c0_i32_0 : i32, i32, i32
  }
  func.func @transform_4(%arg0: i32, %arg1: i32) -> (i32, i32, i32) {
    %c0_i32 = arith.constant 0 : i32
    %c0_i32_0 = arith.constant 0 : i32
    %c0_i32_1 = arith.constant 0 : i32
    return %arg1, %c0_i32, %c0_i32_0 : i32, i32, i32
  }
  func.func @transform_5(%arg0: i32, %arg1: i32) -> (i32, i32, i32) {
    %c0_i32 = arith.constant 0 : i32
    %c0_i32_0 = arith.constant 0 : i32
    %c0_i32_1 = arith.constant 0 : i32
    return %arg1, %c0_i32, %c0_i32_0 : i32, i32, i32
  }
  func.func @transform_6(%arg0: i32, %arg1: i32) -> (i32, i32, i32) {
    %c0_i32 = arith.constant 0 : i32
    %c0_i32_0 = arith.constant 0 : i32
    %c0_i32_1 = arith.constant 0 : i32
    return %arg1, %c0_i32, %c0_i32_0 : i32, i32, i32
  }
  func.func @transform_7(%arg0: i32, %arg1: i32) -> (i32, i32, i32) {
    %c0_i32 = arith.constant 0 : i32
    %c0_i32_0 = arith.constant 0 : i32
    %c0_i32_1 = arith.constant 0 : i32
    return %arg1, %c0_i32, %c0_i32_0 : i32, i32, i32
  }
  func.func @transform_8(%arg0: i32, %arg1: i32) -> (i32, i32, i32) {
    %c0_i32 = arith.constant 0 : i32
    %c0_i32_0 = arith.constant 0 : i32
    %c0_i32_1 = arith.constant 0 : i32
    return %arg1, %c0_i32, %c0_i32_0 : i32, i32, i32
  }
  func.func @transform_9(%arg0: i32, %arg1: i32) -> (i32, i32, i32) {
    %c0_i32 = arith.constant 0 : i32
    %c0_i32_0 = arith.constant 0 : i32
    %c0_i32_1 = arith.constant 0 : i32
    return %arg1, %c0_i32, %c0_i32_0 : i32, i32, i32
  }
  func.func @transform_10(%arg0: i32, %arg1: i32) -> (i32, i32, i32) {
    %c0_i32 = arith.constant 0 : i32
    %c0_i32_0 = arith.constant 0 : i32
    %c0_i32_1 = arith.constant 0 : i32
    return %arg1, %c0_i32, %c0_i32_0 : i32, i32, i32
  }
  func.func @transform_11(%arg0: i32, %arg1: i32) -> (i32, i32, i32) {
    %c0_i32 = arith.constant 0 : i32
    %c0_i32_0 = arith.constant 0 : i32
    %c0_i32_1 = arith.constant 0 : i32
    return %arg1, %c0_i32, %c0_i32_0 : i32, i32, i32
  }
  func.func @transform_12(%arg0: i32, %arg1: i32) -> (i32, i32, i32) {
    %c0_i32 = arith.constant 0 : i32
    %c0_i32_0 = arith.constant 0 : i32
    %c0_i32_1 = arith.constant 0 : i32
    return %arg1, %c0_i32, %c0_i32_0 : i32, i32, i32
  }
  func.func @transform_13(%arg0: i32, %arg1: i32) -> (i32, i32, i32) {
    %c0_i32 = arith.constant 0 : i32
    %c0_i32_0 = arith.constant 0 : i32
    %c0_i32_1 = arith.constant 0 : i32
    return %arg1, %c0_i32, %c0_i32_0 : i32, i32, i32
  }
  func.func @transform_14(%arg0: i32, %arg1: i32) -> (i32, i32, i32) {
    %c0_i32 = arith.constant 0 : i32
    %c0_i32_0 = arith.constant 0 : i32
    %c0_i32_1 = arith.constant 0 : i32
    return %arg1, %c0_i32, %c0_i32_0 : i32, i32, i32
  }
  func.func @transform_15(%arg0: i32, %arg1: i32) -> (i32, i32, i32) {
    %c0_i32 = arith.constant 0 : i32
    %c0_i32_0 = arith.constant 0 : i32
    %c0_i32_1 = arith.constant 0 : i32
    return %arg1, %c0_i32, %c0_i32_0 : i32, i32, i32
  }
  func.func @transform_16(%arg0: i32, %arg1: i32) -> (i32, i32, i32) {
    %c0_i32 = arith.constant 0 : i32
    %c0_i32_0 = arith.constant 0 : i32
    %c0_i32_1 = arith.constant 0 : i32
    return %arg1, %c0_i32, %c0_i32_0 : i32, i32, i32
  }
  func.func @transform_17(%arg0: i32, %arg1: i32) -> (i32, i32, i32) {
    %c0_i32 = arith.constant 0 : i32
    %c0_i32_0 = arith.constant 0 : i32
    %c0_i32_1 = arith.constant 0 : i32
    return %arg1, %c0_i32, %c0_i32_0 : i32, i32, i32
  }
  func.func @transform_18(%arg0: i32, %arg1: i32) -> (i32, i32, i32) {
    %c0_i32 = arith.constant 0 : i32
    %c0_i32_0 = arith.constant 0 : i32
    %c0_i32_1 = arith.constant 0 : i32
    return %arg1, %c0_i32, %c0_i32_0 : i32, i32, i32
  }
  func.func @transform_19(%arg0: i32, %arg1: i32) -> (i32, i32) {
    %c0_i32 = arith.constant 0 : i32
    %c0_i32_0 = arith.constant 0 : i32
    return %arg0, %c0_i32 : i32, i32
  }
}

</mosaic_0001>

<llo_original>
// kernel: seq_forward.1
$region0: #{seq_forward.1}
  #allocation0 [shape = 'u32[]', space=smem, size = 0x4, offset = 0x4, fixed_abs, tag = 'smem constant byte address 0x4 - core index']
  #allocation1 [shape = 'u32[72,128]{1,0:T(1,128)}', space=vmem, size = 0x9000, scoped, tag = 'internal scratch']
  #allocation2 [shape = 'f32[32,32]{1,0:T(8,128)}', space=vmem, size = 0x4000, scoped, tag = 'scratch operand']
  %s0 = inlined_call_operand.vmem [shape: f32[32,32], index: 0, kind: input, shape index: {}]
  %s1 = inlined_call_operand.vmem [shape: f32[4,8], index: 1, kind: input, shape index: {}]
  %s2 = inlined_call_operand.vmem [shape: f32[32,1], index: 2, kind: input, shape index: {}]
  %s3 = inlined_call_operand.vmem [shape: bf16[2,32,32], index: 3, kind: input, shape index: {}]
  %s4 = inlined_call_operand.vmem [shape: f32[2,1,32], index: 4, kind: input, shape index: {}]
  %s5 = inlined_call_operand.vmem [shape: bf16[2,32,32], index: 5, kind: input, shape index: {}]
  %s6 = inlined_call_operand.vmem [shape: f32[2,1,32], index: 6, kind: input, shape index: {}]
  %s7 = inlined_call_operand.vmem [shape: bf16[2,32,32], index: 7, kind: input, shape index: {}]
  %s8 = inlined_call_operand.vmem [shape: f32[2,1,32], index: 8, kind: input, shape index: {}]
  %s9 = inlined_call_operand.vmem [shape: bf16[2,32,32], index: 9, kind: input, shape index: {}]
  %s10 = inlined_call_operand.vmem [shape: f32[2,1,32], index: 10, kind: input, shape index: {}]
  %s11 = inlined_call_operand.vmem [shape: f32[2,1,32], index: 11, kind: input, shape index: {}]
  %s12 = inlined_call_operand.vmem [shape: f32[2,1,32], index: 12, kind: input, shape index: {}]
  %s13 = inlined_call_operand.vmem [shape: f32[2,1,32], index: 13, kind: input, shape index: {}]
  %s14 = inlined_call_operand.vmem [shape: f32[2,1,32], index: 14, kind: input, shape index: {}]
  %s15 = inlined_call_operand.vmem [shape: bf16[2,32,64], index: 15, kind: input, shape index: {}]
  %s16 = inlined_call_operand.vmem [shape: f32[2,1,64], index: 16, kind: input, shape index: {}]
  %s17 = inlined_call_operand.vmem [shape: bf16[2,64,32], index: 17, kind: input, shape index: {}]
  %s18 = inlined_call_operand.vmem [shape: f32[2,1,32], index: 18, kind: input, shape index: {}]
  %s19 = inlined_call_operand.hbm [shape: f32[32,32], index: 19, kind: output, shape index: {}]
  %s20 = sld [smem:[#allocation0]]
  $region117: #{seq_forward.1} parent=0
    _
  %s22 = ssub.s32 1, %s20
  %s23 = scalar_select 0, %s22, %s20
  $region1: #{seq_forward.1} parent=0
    #allocation3 [shape = 'u8[16384]{0}', space=vmem, size = 0x4000, scoped, tag = 'output window, operand 0, single buffered']
    #allocation4 [shape = 's32[2]{0}', space=sflag, size = 0x8, scoped, tag = 'scoped memory for seq_forward.1']
    %24 = vsyncpa [#allocation4], 0
    loop: start=0, step=1, limit=4
    $region2: #{seq_forward.1} parent=1 // loop_pre_header
      _
    $region3: #{seq_forward.1} parent=1 // loop_header
      %s26 = sphi 0, %s30
      %p27 = scmp.ge.s32.totalorder %s26, 4
      %s33 = sphi 0, %s45
      %s34 = sphi 0, %s41
      %s35 = sphi 0, %s33
      %s36 = sphi 0, %s34
      %s37 = sphi 0, %s35
      %s38 = sphi 0, %s36
      %s48 = sphi 0, %s50
      %s51 = sphi 0, %s48
      %s52 = sphi 0, %s51
      %s68 = sphi 0, %s52
      %s74 = sphi 0, %s76
      %s77 = sphi 0, %s74
      %s78 = sphi 0, %s77
      %s94 = sphi 0, %s78
      %s100 = sphi 0, %s102
      %s103 = sphi 0, %s100
      %s104 = sphi 0, %s103
      %s120 = sphi 0, %s104
      %s126 = sphi 0, %s128
      %s129 = sphi 0, %s126
      %s130 = sphi 0, %s129
      %s146 = sphi 0, %s130
      %s152 = sphi 0, %s154
      %s155 = sphi 0, %s152
      %s156 = sphi 0, %s155
      %s172 = sphi 0, %s156
      %s178 = sphi 0, %s180
      %s181 = sphi 0, %s178
      %s182 = sphi 0, %s181
      %s198 = sphi 0, %s182
      %s204 = sphi 0, %s206
      %s207 = sphi 0, %s204
      %s208 = sphi 0, %s207
      %s224 = sphi 0, %s208
      %s230 = sphi 0, %s232
      %s233 = sphi 0, %s230
      %s234 = sphi 0, %s233
      %s250 = sphi 0, %s234
      %s256 = sphi 0, %s258
      %s259 = sphi 0, %s256
      %s260 = sphi 0, %s259
      %s276 = sphi 0, %s260
      %s282 = sphi 0, %s284
      %s285 = sphi 0, %s282
      %s286 = sphi 0, %s285
      %s302 = sphi 0, %s286
      %s308 = sphi 0, %s310
      %s311 = sphi 0, %s308
      %s312 = sphi 0, %s311
      %s328 = sphi 0, %s312
      %s334 = sphi 0, %s336
      %s337 = sphi 0, %s334
      %s338 = sphi 0, %s337
      %s354 = sphi 0, %s338
      %s360 = sphi 0, %s362
      %s363 = sphi 0, %s360
      %s364 = sphi 0, %s363
      %s380 = sphi 0, %s364
      %s386 = sphi 0, %s388
      %s389 = sphi 0, %s386
      %s390 = sphi 0, %s389
      %s406 = sphi 0, %s390
      %s412 = sphi 0, %s414
      %s415 = sphi 0, %s412
      %s416 = sphi 0, %s415
      %s432 = sphi 0, %s416
      %s438 = sphi 0, %s440
      %s441 = sphi 0, %s438
      %s442 = sphi 0, %s441
      %s458 = sphi 0, %s442
      %s464 = sphi 0, %s466
      %s467 = sphi 0, %s464
      %s468 = sphi 0, %s467
      %s484 = sphi 0, %s468
      %s490 = sphi 0, %s492
      %s493 = sphi 0, %s490
      %s494 = sphi 0, %s493
      %s510 = sphi 0, %s494
      %s516 = sphi 0, %s518
      %s519 = sphi 0, %s516
      %s520 = sphi 0, %s519
      %s536 = sphi 0, %s520
      %s542 = sphi 0, %s544
      %s545 = sphi 0, %s542
      %s546 = sphi 0, %s545
      %s562 = sphi 0, %s546
    $region4: #{seq_forward.1} parent=1 // loop_header_branch
      %29 = sbr.rel (%p27) target = $region8
    $region5: #{seq_forward.1} parent=1 // loop_body
      %s31 = ssub.s32 %s26, 1
      %s32 = ssub.s32 %s26, 2
      %s39 = sadd.s32 1, %s34
      %p40 = scmp.ge.s32.totalorder %s39, 2
      %s41 = scalar_select %p40, 0, %s39
      %s42 = sadd.s32 1, %s33
      %s43 = scalar_select %p40, %s42, %s33
      %p44 = scmp.ge.s32.totalorder %s43, 1
      %s45 = scalar_select %p44, 0, %s43
      %s46 = ssub.s32 %s33, %s45
      %p47 = scmp.eq.s32.totalorder %s46, 0
      %s49 = sadd.s32 %s48, 1
      %s50 = scalar_select %p47, %s48, %s49
      %p53 = pneg %p47
      %p54 = scmp.eq.s32.totalorder %s26, 1
      %p55 = por %p53, %p54
      %p56 = scmp.ne.s32.totalorder %s48, %s51
      %p57 = scmp.eq.s32.totalorder %s26, 0
      %p58 = por %p56, %p57
      %p59 = scmp.ne.s32.totalorder %s48, %s51
      %p60 = scmp.eq.s32.totalorder %s31, 1
      %p61 = por %p59, %p60
      %p62 = scmp.ne.s32.totalorder %s51, %s52
      %p63 = scmp.eq.s32.totalorder %s31, 0
      %p64 = por %p62, %p63
      %p65 = scmp.ne.s32.totalorder %s51, %s52
      %p66 = scmp.eq.s32.totalorder %s32, 1
      %p67 = por %p65, %p66
      %p69 = scmp.ne.s32.totalorder %s52, %s68
      %p70 = scmp.eq.s32.totalorder %s32, 0
      %p71 = por %p69, %p70
      %s72 = ssub.s32 %s33, %s45
      %p73 = scmp.eq.s32.totalorder %s72, 0
      %s75 = sadd.s32 %s74, 1
      %s76 = scalar_select %p73, %s74, %s75
      %p79 = pneg %p73
      %p80 = scmp.eq.s32.totalorder %s26, 1
      %p81 = por %p79, %p80
      %p82 = scmp.ne.s32.totalorder %s74, %s77
      %p83 = scmp.eq.s32.totalorder %s26, 0
      %p84 = por %p82, %p83
      %p85 = scmp.ne.s32.totalorder %s74, %s77
      %p86 = scmp.eq.s32.totalorder %s31, 1
      %p87 = por %p85, %p86
      %p88 = scmp.ne.s32.totalorder %s77, %s78
      %p89 = scmp.eq.s32.totalorder %s31, 0
      %p90 = por %p88, %p89
      %p91 = scmp.ne.s32.totalorder %s77, %s78
      %p92 = scmp.eq.s32.totalorder %s32, 1
      %p93 = por %p91, %p92
      %p95 = scmp.ne.s32.totalorder %s78, %s94
      %p96 = scmp.eq.s32.totalorder %s32, 0
      %p97 = por %p95, %p96
      %s98 = ssub.s32 %s33, %s45
      %p99 = scmp.eq.s32.totalorder %s98, 0
      %s101 = sadd.s32 %s100, 1
      %s102 = scalar_select %p99, %s100, %s101
      %p105 = pneg %p99
      %p106 = scmp.eq.s32.totalorder %s26, 1
      %p107 = por %p105, %p106
      %p108 = scmp.ne.s32.totalorder %s100, %s103
      %p109 = scmp.eq.s32.totalorder %s26, 0
      %p110 = por %p108, %p109
      %p111 = scmp.ne.s32.totalorder %s100, %s103
      %p112 = scmp.eq.s32.totalorder %s31, 1
      %p113 = por %p111, %p112
      %p114 = scmp.ne.s32.totalorder %s103, %s104
      %p115 = scmp.eq.s32.totalorder %s31, 0
      %p116 = por %p114, %p115
      %p117 = scmp.ne.s32.totalorder %s103, %s104
      %p118 = scmp.eq.s32.totalorder %s32, 1
      %p119 = por %p117, %p118
      %p121 = scmp.ne.s32.totalorder %s104, %s120
      %p122 = scmp.eq.s32.totalorder %s32, 0
      %p123 = por %p121, %p122
      %s124 = ssub.s32 %s34, %s41
      %p125 = scmp.eq.s32.totalorder %s124, 0
      %s127 = sadd.s32 %s126, 1
      %s128 = scalar_select %p125, %s126, %s127
      %p131 = pneg %p125
      %p132 = scmp.eq.s32.totalorder %s26, 1
      %p133 = por %p131, %p132
      %p134 = scmp.ne.s32.totalorder %s126, %s129
      %p135 = scmp.eq.s32.totalorder %s26, 0
      %p136 = por %p134, %p135
      %p137 = scmp.ne.s32.totalorder %s126, %s129
      %p138 = scmp.eq.s32.totalorder %s31, 1
      %p139 = por %p137, %p138
      %p140 = scmp.ne.s32.totalorder %s129, %s130
      %p141 = scmp.eq.s32.totalorder %s31, 0
      %p142 = por %p140, %p141
      %p143 = scmp.ne.s32.totalorder %s129, %s130
      %p144 = scmp.eq.s32.totalorder %s32, 1
      %p145 = por %p143, %p144
      %p147 = scmp.ne.s32.totalorder %s130, %s146
      %p148 = scmp.eq.s32.totalorder %s32, 0
      %p149 = por %p147, %p148
      %s150 = ssub.s32 %s34, %s41
      %p151 = scmp.eq.s32.totalorder %s150, 0
      %s153 = sadd.s32 %s152, 1
      %s154 = scalar_select %p151, %s152, %s153
      %p157 = pneg %p151
      %p158 = scmp.eq.s32.totalorder %s26, 1
      %p159 = por %p157, %p158
      %p160 = scmp.ne.s32.totalorder %s152, %s155
      %p161 = scmp.eq.s32.totalorder %s26, 0
      %p162 = por %p160, %p161
      %p163 = scmp.ne.s32.totalorder %s152, %s155
      %p164 = scmp.eq.s32.totalorder %s31, 1
      %p165 = por %p163, %p164
      %p166 = scmp.ne.s32.totalorder %s155, %s156
      %p167 = scmp.eq.s32.totalorder %s31, 0
      %p168 = por %p166, %p167
      %p169 = scmp.ne.s32.totalorder %s155, %s156
      %p170 = scmp.eq.s32.totalorder %s32, 1
      %p171 = por %p169, %p170
      %p173 = scmp.ne.s32.totalorder %s156, %s172
      %p174 = scmp.eq.s32.totalorder %s32, 0
      %p175 = por %p173, %p174
      %s176 = ssub.s32 %s34, %s41
      %p177 = scmp.eq.s32.totalorder %s176, 0
      %s179 = sadd.s32 %s178, 1
      %s180 = scalar_select %p177, %s178, %s179
      %p183 = pneg %p177
      %p184 = scmp.eq.s32.totalorder %s26, 1
      %p185 = por %p183, %p184
      %p186 = scmp.ne.s32.totalorder %s178, %s181
      %p187 = scmp.eq.s32.totalorder %s26, 0
      %p188 = por %p186, %p187
      %p189 = scmp.ne.s32.totalorder %s178, %s181
      %p190 = scmp.eq.s32.totalorder %s31, 1
      %p191 = por %p189, %p190
      %p192 = scmp.ne.s32.totalorder %s181, %s182
      %p193 = scmp.eq.s32.totalorder %s31, 0
      %p194 = por %p192, %p193
      %p195 = scmp.ne.s32.totalorder %s181, %s182
      %p196 = scmp.eq.s32.totalorder %s32, 1
      %p197 = por %p195, %p196
      %p199 = scmp.ne.s32.totalorder %s182, %s198
      %p200 = scmp.eq.s32.totalorder %s32, 0
      %p201 = por %p199, %p200
      %s202 = ssub.s32 %s34, %s41
      %p203 = scmp.eq.s32.totalorder %s202, 0
      %s205 = sadd.s32 %s204, 1
      %s206 = scalar_select %p203, %s204, %s205
      %p209 = pneg %p203
      %p210 = scmp.eq.s32.totalorder %s26, 1
      %p211 = por %p209, %p210
      %p212 = scmp.ne.s32.totalorder %s204, %s207
      %p213 = scmp.eq.s32.totalorder %s26, 0
      %p214 = por %p212, %p213
      %p215 = scmp.ne.s32.totalorder %s204, %s207
      %p216 = scmp.eq.s32.totalorder %s31, 1
      %p217 = por %p215, %p216
      %p218 = scmp.ne.s32.totalorder %s207, %s208
      %p219 = scmp.eq.s32.totalorder %s31, 0
      %p220 = por %p218, %p219
      %p221 = scmp.ne.s32.totalorder %s207, %s208
      %p222 = scmp.eq.s32.totalorder %s32, 1
      %p223 = por %p221, %p222
      %p225 = scmp.ne.s32.totalorder %s208, %s224
      %p226 = scmp.eq.s32.totalorder %s32, 0
      %p227 = por %p225, %p226
      %s228 = ssub.s32 %s34, %s41
      %p229 = scmp.eq.s32.totalorder %s228, 0
      %s231 = sadd.s32 %s230, 1
      %s232 = scalar_select %p229, %s230, %s231
      %p235 = pneg %p229
      %p236 = scmp.eq.s32.totalorder %s26, 1
      %p237 = por %p235, %p236
      %p238 = scmp.ne.s32.totalorder %s230, %s233
      %p239 = scmp.eq.s32.totalorder %s26, 0
      %p240 = por %p238, %p239
      %p241 = scmp.ne.s32.totalorder %s230, %s233
      %p242 = scmp.eq.s32.totalorder %s31, 1
      %p243 = por %p241, %p242
      %p244 = scmp.ne.s32.totalorder %s233, %s234
      %p245 = scmp.eq.s32.totalorder %s31, 0
      %p246 = por %p244, %p245
      %p247 = scmp.ne.s32.totalorder %s233, %s234
      %p248 = scmp.eq.s32.totalorder %s32, 1
      %p249 = por %p247, %p248
      %p251 = scmp.ne.s32.totalorder %s234, %s250
      %p252 = scmp.eq.s32.totalorder %s32, 0
      %p253 = por %p251, %p252
      %s254 = ssub.s32 %s34, %s41
      %p255 = scmp.eq.s32.totalorder %s254, 0
      %s257 = sadd.s32 %s256, 1
      %s258 = scalar_select %p255, %s256, %s257
      %p261 = pneg %p255
      %p262 = scmp.eq.s32.totalorder %s26, 1
      %p263 = por %p261, %p262
      %p264 = scmp.ne.s32.totalorder %s256, %s259
      %p265 = scmp.eq.s32.totalorder %s26, 0
      %p266 = por %p264, %p265
      %p267 = scmp.ne.s32.totalorder %s256, %s259
      %p268 = scmp.eq.s32.totalorder %s31, 1
      %p269 = por %p267, %p268
      %p270 = scmp.ne.s32.totalorder %s259, %s260
      %p271 = scmp.eq.s32.totalorder %s31, 0
      %p272 = por %p270, %p271
      %p273 = scmp.ne.s32.totalorder %s259, %s260
      %p274 = scmp.eq.s32.totalorder %s32, 1
      %p275 = por %p273, %p274
      %p277 = scmp.ne.s32.totalorder %s260, %s276
      %p278 = scmp.eq.s32.totalorder %s32, 0
      %p279 = por %p277, %p278
      %s280 = ssub.s32 %s34, %s41
      %p281 = scmp.eq.s32.totalorder %s280, 0
      %s283 = sadd.s32 %s282, 1
      %s284 = scalar_select %p281, %s282, %s283
      %p287 = pneg %p281
      %p288 = scmp.eq.s32.totalorder %s26, 1
      %p289 = por %p287, %p288
      %p290 = scmp.ne.s32.totalorder %s282, %s285
      %p291 = scmp.eq.s32.totalorder %s26, 0
      %p292 = por %p290, %p291
      %p293 = scmp.ne.s32.totalorder %s282, %s285
      %p294 = scmp.eq.s32.totalorder %s31, 1
      %p295 = por %p293, %p294
      %p296 = scmp.ne.s32.totalorder %s285, %s286
      %p297 = scmp.eq.s32.totalorder %s31, 0
      %p298 = por %p296, %p297
      %p299 = scmp.ne.s32.totalorder %s285, %s286
      %p300 = scmp.eq.s32.totalorder %s32, 1
      %p301 = por %p299, %p300
      %p303 = scmp.ne.s32.totalorder %s286, %s302
      %p304 = scmp.eq.s32.totalorder %s32, 0
      %p305 = por %p303, %p304
      %s306 = ssub.s32 %s34, %s41
      %p307 = scmp.eq.s32.totalorder %s306, 0
      %s309 = sadd.s32 %s308, 1
      %s310 = scalar_select %p307, %s308, %s309
      %p313 = pneg %p307
      %p314 = scmp.eq.s32.totalorder %s26, 1
      %p315 = por %p313, %p314
      %p316 = scmp.ne.s32.totalorder %s308, %s311
      %p317 = scmp.eq.s32.totalorder %s26, 0
      %p318 = por %p316, %p317
      %p319 = scmp.ne.s32.totalorder %s308, %s311
      %p320 = scmp.eq.s32.totalorder %s31, 1
      %p321 = por %p319, %p320
      %p322 = scmp.ne.s32.totalorder %s311, %s312
      %p323 = scmp.eq.s32.totalorder %s31, 0
      %p324 = por %p322, %p323
      %p325 = scmp.ne.s32.totalorder %s311, %s312
      %p326 = scmp.eq.s32.totalorder %s32, 1
      %p327 = por %p325, %p326
      %p329 = scmp.ne.s32.totalorder %s312, %s328
      %p330 = scmp.eq.s32.totalorder %s32, 0
      %p331 = por %p329, %p330
      %s332 = ssub.s32 %s34, %s41
      %p333 = scmp.eq.s32.totalorder %s332, 0
      %s335 = sadd.s32 %s334, 1
      %s336 = scalar_select %p333, %s334, %s335
      %p339 = pneg %p333
      %p340 = scmp.eq.s32.totalorder %s26, 1
      %p341 = por %p339, %p340
      %p342 = scmp.ne.s32.totalorder %s334, %s337
      %p343 = scmp.eq.s32.totalorder %s26, 0
      %p344 = por %p342, %p343
      %p345 = scmp.ne.s32.totalorder %s334, %s337
      %p346 = scmp.eq.s32.totalorder %s31, 1
      %p347 = por %p345, %p346
      %p348 = scmp.ne.s32.totalorder %s337, %s338
      %p349 = scmp.eq.s32.totalorder %s31, 0
      %p350 = por %p348, %p349
      %p351 = scmp.ne.s32.totalorder %s337, %s338
      %p352 = scmp.eq.s32.totalorder %s32, 1
      %p353 = por %p351, %p352
      %p355 = scmp.ne.s32.totalorder %s338, %s354
      %p356 = scmp.eq.s32.totalorder %s32, 0
      %p357 = por %p355, %p356
      %s358 = ssub.s32 %s34, %s41
      %p359 = scmp.eq.s32.totalorder %s358, 0
      %s361 = sadd.s32 %s360, 1
      %s362 = scalar_select %p359, %s360, %s361
      %p365 = pneg %p359
      %p366 = scmp.eq.s32.totalorder %s26, 1
      %p367 = por %p365, %p366
      %p368 = scmp.ne.s32.totalorder %s360, %s363
      %p369 = scmp.eq.s32.totalorder %s26, 0
      %p370 = por %p368, %p369
      %p371 = scmp.ne.s32.totalorder %s360, %s363
      %p372 = scmp.eq.s32.totalorder %s31, 1
      %p373 = por %p371, %p372
      %p374 = scmp.ne.s32.totalorder %s363, %s364
      %p375 = scmp.eq.s32.totalorder %s31, 0
      %p376 = por %p374, %p375
      %p377 = scmp.ne.s32.totalorder %s363, %s364
      %p378 = scmp.eq.s32.totalorder %s32, 1
      %p379 = por %p377, %p378
      %p381 = scmp.ne.s32.totalorder %s364, %s380
      %p382 = scmp.eq.s32.totalorder %s32, 0
      %p383 = por %p381, %p382
      %s384 = ssub.s32 %s34, %s41
      %p385 = scmp.eq.s32.totalorder %s384, 0
      %s387 = sadd.s32 %s386, 1
      %s388 = scalar_select %p385, %s386, %s387
      %p391 = pneg %p385
      %p392 = scmp.eq.s32.totalorder %s26, 1
      %p393 = por %p391, %p392
      %p394 = scmp.ne.s32.totalorder %s386, %s389
      %p395 = scmp.eq.s32.totalorder %s26, 0
      %p396 = por %p394, %p395
      %p397 = scmp.ne.s32.totalorder %s386, %s389
      %p398 = scmp.eq.s32.totalorder %s31, 1
      %p399 = por %p397, %p398
      %p400 = scmp.ne.s32.totalorder %s389, %s390
      %p401 = scmp.eq.s32.totalorder %s31, 0
      %p402 = por %p400, %p401
      %p403 = scmp.ne.s32.totalorder %s389, %s390
      %p404 = scmp.eq.s32.totalorder %s32, 1
      %p405 = por %p403, %p404
      %p407 = scmp.ne.s32.totalorder %s390, %s406
      %p408 = scmp.eq.s32.totalorder %s32, 0
      %p409 = por %p407, %p408
      %s410 = ssub.s32 %s34, %s41
      %p411 = scmp.eq.s32.totalorder %s410, 0
      %s413 = sadd.s32 %s412, 1
      %s414 = scalar_select %p411, %s412, %s413
      %p417 = pneg %p411
      %p418 = scmp.eq.s32.totalorder %s26, 1
      %p419 = por %p417, %p418
      %p420 = scmp.ne.s32.totalorder %s412, %s415
      %p421 = scmp.eq.s32.totalorder %s26, 0
      %p422 = por %p420, %p421
      %p423 = scmp.ne.s32.totalorder %s412, %s415
      %p424 = scmp.eq.s32.totalorder %s31, 1
      %p425 = por %p423, %p424
      %p426 = scmp.ne.s32.totalorder %s415, %s416
      %p427 = scmp.eq.s32.totalorder %s31, 0
      %p428 = por %p426, %p427
      %p429 = scmp.ne.s32.totalorder %s415, %s416
      %p430 = scmp.eq.s32.totalorder %s32, 1
      %p431 = por %p429, %p430
      %p433 = scmp.ne.s32.totalorder %s416, %s432
      %p434 = scmp.eq.s32.totalorder %s32, 0
      %p435 = por %p433, %p434
      %s436 = ssub.s32 %s34, %s41
      %p437 = scmp.eq.s32.totalorder %s436, 0
      %s439 = sadd.s32 %s438, 1
      %s440 = scalar_select %p437, %s438, %s439
      %p443 = pneg %p437
      %p444 = scmp.eq.s32.totalorder %s26, 1
      %p445 = por %p443, %p444
      %p446 = scmp.ne.s32.totalorder %s438, %s441
      %p447 = scmp.eq.s32.totalorder %s26, 0
      %p448 = por %p446, %p447
      %p449 = scmp.ne.s32.totalorder %s438, %s441
      %p450 = scmp.eq.s32.totalorder %s31, 1
      %p451 = por %p449, %p450
      %p452 = scmp.ne.s32.totalorder %s441, %s442
      %p453 = scmp.eq.s32.totalorder %s31, 0
      %p454 = por %p452, %p453
      %p455 = scmp.ne.s32.totalorder %s441, %s442
      %p456 = scmp.eq.s32.totalorder %s32, 1
      %p457 = por %p455, %p456
      %p459 = scmp.ne.s32.totalorder %s442, %s458
      %p460 = scmp.eq.s32.totalorder %s32, 0
      %p461 = por %p459, %p460
      %s462 = ssub.s32 %s34, %s41
      %p463 = scmp.eq.s32.totalorder %s462, 0
      %s465 = sadd.s32 %s464, 1
      %s466 = scalar_select %p463, %s464, %s465
      %p469 = pneg %p463
      %p470 = scmp.eq.s32.totalorder %s26, 1
      %p471 = por %p469, %p470
      %p472 = scmp.ne.s32.totalorder %s464, %s467
      %p473 = scmp.eq.s32.totalorder %s26, 0
      %p474 = por %p472, %p473
      %p475 = scmp.ne.s32.totalorder %s464, %s467
      %p476 = scmp.eq.s32.totalorder %s31, 1
      %p477 = por %p475, %p476
      %p478 = scmp.ne.s32.totalorder %s467, %s468
      %p479 = scmp.eq.s32.totalorder %s31, 0
      %p480 = por %p478, %p479
      %p481 = scmp.ne.s32.totalorder %s467, %s468
      %p482 = scmp.eq.s32.totalorder %s32, 1
      %p483 = por %p481, %p482
      %p485 = scmp.ne.s32.totalorder %s468, %s484
      %p486 = scmp.eq.s32.totalorder %s32, 0
      %p487 = por %p485, %p486
      %s488 = ssub.s32 %s34, %s41
      %p489 = scmp.eq.s32.totalorder %s488, 0
      %s491 = sadd.s32 %s490, 1
      %s492 = scalar_select %p489, %s490, %s491
      %p495 = pneg %p489
      %p496 = scmp.eq.s32.totalorder %s26, 1
      %p497 = por %p495, %p496
      %p498 = scmp.ne.s32.totalorder %s490, %s493
      %p499 = scmp.eq.s32.totalorder %s26, 0
      %p500 = por %p498, %p499
      %p501 = scmp.ne.s32.totalorder %s490, %s493
      %p502 = scmp.eq.s32.totalorder %s31, 1
      %p503 = por %p501, %p502
      %p504 = scmp.ne.s32.totalorder %s493, %s494
      %p505 = scmp.eq.s32.totalorder %s31, 0
      %p506 = por %p504, %p505
      %p507 = scmp.ne.s32.totalorder %s493, %s494
      %p508 = scmp.eq.s32.totalorder %s32, 1
      %p509 = por %p507, %p508
      %p511 = scmp.ne.s32.totalorder %s494, %s510
      %p512 = scmp.eq.s32.totalorder %s32, 0
      %p513 = por %p511, %p512
      %s514 = ssub.s32 %s34, %s41
      %p515 = scmp.eq.s32.totalorder %s514, 0
      %s517 = sadd.s32 %s516, 1
      %s518 = scalar_select %p515, %s516, %s517
      %p521 = pneg %p515
      %p522 = scmp.eq.s32.totalorder %s26, 1
      %p523 = por %p521, %p522
      %p524 = scmp.ne.s32.totalorder %s516, %s519
      %p525 = scmp.eq.s32.totalorder %s26, 0
      %p526 = por %p524, %p525
      %p527 = scmp.ne.s32.totalorder %s516, %s519
      %p528 = scmp.eq.s32.totalorder %s31, 1
      %p529 = por %p527, %p528
      %p530 = scmp.ne.s32.totalorder %s519, %s520
      %p531 = scmp.eq.s32.totalorder %s31, 0
      %p532 = por %p530, %p531
      %p533 = scmp.ne.s32.totalorder %s519, %s520
      %p534 = scmp.eq.s32.totalorder %s32, 1
      %p535 = por %p533, %p534
      %p537 = scmp.ne.s32.totalorder %s520, %s536
      %p538 = scmp.eq.s32.totalorder %s32, 0
      %p539 = por %p537, %p538
      %s540 = ssub.s32 %s33, %s45
      %p541 = scmp.eq.s32.totalorder %s540, 0
      %s543 = sadd.s32 %s542, 1
      %s544 = scalar_select %p541, %s542, %s543
      %p547 = pneg %p541
      %p548 = scmp.eq.s32.totalorder %s26, 1
      %p549 = por %p547, %p548
      %p550 = scmp.ne.s32.totalorder %s542, %s545
      %p551 = scmp.eq.s32.totalorder %s26, 0
      %p552 = por %p550, %p551
      %p553 = scmp.ne.s32.totalorder %s542, %s545
      %p554 = scmp.eq.s32.totalorder %s31, 1
      %p555 = por %p553, %p554
      %p556 = scmp.ne.s32.totalorder %s545, %s546
      %p557 = scmp.eq.s32.totalorder %s31, 0
      %p558 = por %p556, %p557
      %p559 = scmp.ne.s32.totalorder %s545, %s546
      %p560 = scmp.eq.s32.totalorder %s32, 1
      %p561 = por %p559, %p560
      %p563 = scmp.ne.s32.totalorder %s546, %s562
      %p564 = scmp.eq.s32.totalorder %s32, 0
      %p565 = por %p563, %p564
      %p566 = scmp.le.s32.totalorder 1, %s26
      %p567 = scmp.lt.s32.totalorder %s26, 3
      %p568 = pnand %p566, %p567
      %p569 = pneg %p568
      // Predicated region
      $region9: #{seq_forward.1} parent=5 // pred_check
        _
      $region10: #{seq_forward.1} parent=5 // pred_check_branch
        %571 = sbr.rel (%p568) target = $region12
      $region11: #{seq_forward.1} parent=5 // pred_region
        %s572 = ssub.s32 %s26, 1
        // Predicated region
        $region13: #{seq_forward.1} parent=11 // pred_check
          %p573 = pneg %p64
        $region14: #{seq_forward.1} parent=11 // pred_check_branch
          %575 = sbr.rel (%p573) target = $region16
        $region15: #{seq_forward.1} parent=11 // pred_region
          %s576 = smul.u32 4, %s35
          %p577 = scmp.lt.s32.totalorder %s576, 3
          %s578 = scalar_select %p577, %s576, 3
          %s579 = smul.addr %s578, 8
          %s580 = scalar_lea.vmem %s0, %s579
          %s581 = smul.u32 4, %s35
        $region16: #{seq_forward.1} parent=11 // pred_fallthru
          _
        // Predicated region
        $region17: #{seq_forward.1} parent=11 // pred_check
          %p582 = pneg %p90
        $region18: #{seq_forward.1} parent=11 // pred_check_branch
          %584 = sbr.rel (%p582) target = $region20
        $region19: #{seq_forward.1} parent=11 // pred_region
          %p585 = scmp.lt.s32.totalorder %s35, 0
          %s586 = scalar_select %p585, %s35, 0
          %s587 = smul.addr %s586, 4
          %s588 = scalar_lea.vmem %s1, %s587
        $region20: #{seq_forward.1} parent=11 // pred_fallthru
          _
        // Predicated region
        $region21: #{seq_forward.1} parent=11 // pred_check
          %p589 = pneg %p116
        $region22: #{seq_forward.1} parent=11 // pred_check_branch
          %591 = sbr.rel (%p589) target = $region24
        $region23: #{seq_forward.1} parent=11 // pred_region
          %s592 = smul.u32 4, %s35
          %p593 = scmp.lt.s32.totalorder %s592, 3
          %s594 = scalar_select %p593, %s592, 3
          %s595 = smul.addr %s594, 8
          %s596 = scalar_lea.vmem %s2, %s595
          %s597 = smul.u32 4, %s35
        $region24: #{seq_forward.1} parent=11 // pred_fallthru
          _
      $region12: #{seq_forward.1} parent=5 // pred_fallthru
        _
      %p598 = scmp.lt.s32.totalorder %s26, 2
      // Predicated region
      $region25: #{seq_forward.1} parent=5 // pred_check
        %p599 = pneg %p598
      $region26: #{seq_forward.1} parent=5 // pred_check_branch
        %601 = sbr.rel (%p599) target = $region28
      $region27: #{seq_forward.1} parent=5 // pred_region
        // Predicated region
        $region29: #{seq_forward.1} parent=27 // pred_check
          %p602 = pneg %p136
        $region30: #{seq_forward.1} parent=27 // pred_check_branch
          %604 = sbr.rel (%p602) target = $region32
        $region31: #{seq_forward.1} parent=27 // pred_region
          %p605 = scmp.lt.s32.totalorder %s34, 1
          %s606 = scalar_select %p605, %s34, 1
          %s607 = smul.addr %s606, 4
          %s608 = smul.addr %s607, 4
          %s609 = scalar_lea.vmem %s3, %s608
        $region32: #{seq_forward.1} parent=27 // pred_fallthru
          _
        // Predicated region
        $region33: #{seq_forward.1} parent=27 // pred_check
          %p610 = pneg %p162
        $region34: #{seq_forward.1} parent=27 // pred_check_branch
          %612 = sbr.rel (%p610) target = $region36
        $region35: #{seq_forward.1} parent=27 // pred_region
          %p613 = scmp.lt.s32.totalorder %s34, 1
          %s614 = scalar_select %p613, %s34, 1
          %s615 = scalar_lea.vmem %s4, %s614
        $region36: #{seq_forward.1} parent=27 // pred_fallthru
          _
        // Predicated region
        $region37: #{seq_forward.1} parent=27 // pred_check
          %p616 = pneg %p188
        $region38: #{seq_forward.1} parent=27 // pred_check_branch
          %618 = sbr.rel (%p616) target = $region40
        $region39: #{seq_forward.1} parent=27 // pred_region
          %p619 = scmp.lt.s32.totalorder %s34, 1
          %s620 = scalar_select %p619, %s34, 1
          %s621 = smul.addr %s620, 4
          %s622 = smul.addr %s621, 4
          %s623 = scalar_lea.vmem %s5, %s622
        $region40: #{seq_forward.1} parent=27 // pred_fallthru
          _
        // Predicated region
        $region41: #{seq_forward.1} parent=27 // pred_check
          %p624 = pneg %p214
        $region42: #{seq_forward.1} parent=27 // pred_check_branch
          %626 = sbr.rel (%p624) target = $region44
        $region43: #{seq_forward.1} parent=27 // pred_region
          %p627 = scmp.lt.s32.totalorder %s34, 1
          %s628 = scalar_select %p627, %s34, 1
          %s629 = scalar_lea.vmem %s6, %s628
        $region44: #{seq_forward.1} parent=27 // pred_fallthru
          _
        // Predicated region
        $region45: #{seq_forward.1} parent=27 // pred_check
          %p630 = pneg %p240
        $region46: #{seq_forward.1} parent=27 // pred_check_branch
          %632 = sbr.rel (%p630) target = $region48
        $region47: #{seq_forward.1} parent=27 // pred_region
          %p633 = scmp.lt.s32.totalorder %s34, 1
          %s634 = scalar_select %p633, %s34, 1
          %s635 = smul.addr %s634, 4
          %s636 = smul.addr %s635, 4
          %s637 = scalar_lea.vmem %s7, %s636
        $region48: #{seq_forward.1} parent=27 // pred_fallthru
          _
        // Predicated region
        $region49: #{seq_forward.1} parent=27 // pred_check
          %p638 = pneg %p266
        $region50: #{seq_forward.1} parent=27 // pred_check_branch
          %640 = sbr.rel (%p638) target = $region52
        $region51: #{seq_forward.1} parent=27 // pred_region
          %p641 = scmp.lt.s32.totalorder %s34, 1
          %s642 = scalar_select %p641, %s34, 1
          %s643 = scalar_lea.vmem %s8, %s642
        $region52: #{seq_forward.1} parent=27 // pred_fallthru
          _
        // Predicated region
        $region53: #{seq_forward.1} parent=27 // pred_check
          %p644 = pneg %p292
        $region54: #{seq_forward.1} parent=27 // pred_check_branch
          %646 = sbr.rel (%p644) target = $region56
        $region55: #{seq_forward.1} parent=27 // pred_region
          %p647 = scmp.lt.s32.totalorder %s34, 1
          %s648 = scalar_select %p647, %s34, 1
          %s649 = smul.addr %s648, 4
          %s650 = smul.addr %s649, 4
          %s651 = scalar_lea.vmem %s9, %s650
        $region56: #{seq_forward.1} parent=27 // pred_fallthru
          _
        // Predicated region
        $region57: #{seq_forward.1} parent=27 // pred_check
          %p652 = pneg %p318
        $region58: #{seq_forward.1} parent=27 // pred_check_branch
          %654 = sbr.rel (%p652) target = $region60
        $region59: #{seq_forward.1} parent=27 // pred_region
          %p655 = scmp.lt.s32.totalorder %s34, 1
          %s656 = scalar_select %p655, %s34, 1
          %s657 = scalar_lea.vmem %s10, %s656
        $region60: #{seq_forward.1} parent=27 // pred_fallthru
          _
        // Predicated region
        $region61: #{seq_forward.1} parent=27 // pred_check
          %p658 = pneg %p344
        $region62: #{seq_forward.1} parent=27 // pred_check_branch
          %660 = sbr.rel (%p658) target = $region64
        $region63: #{seq_forward.1} parent=27 // pred_region
          %p661 = scmp.lt.s32.totalorder %s34, 1
          %s662 = scalar_select %p661, %s34, 1
          %s663 = scalar_lea.vmem %s11, %s662
        $region64: #{seq_forward.1} parent=27 // pred_fallthru
          _
        // Predicated region
        $region65: #{seq_forward.1} parent=27 // pred_check
          %p664 = pneg %p370
        $region66: #{seq_forward.1} parent=27 // pred_check_branch
          %666 = sbr.rel (%p664) target = $region68
        $region67: #{seq_forward.1} parent=27 // pred_region
          %p667 = scmp.lt.s32.totalorder %s34, 1
          %s668 = scalar_select %p667, %s34, 1
          %s669 = scalar_lea.vmem %s12, %s668
        $region68: #{seq_forward.1} parent=27 // pred_fallthru
          _
        // Predicated region
        $region69: #{seq_forward.1} parent=27 // pred_check
          %p670 = pneg %p396
        $region70: #{seq_forward.1} parent=27 // pred_check_branch
          %672 = sbr.rel (%p670) target = $region72
        $region71: #{seq_forward.1} parent=27 // pred_region
          %p673 = scmp.lt.s32.totalorder %s34, 1
          %s674 = scalar_select %p673, %s34, 1
          %s675 = scalar_lea.vmem %s13, %s674
        $region72: #{seq_forward.1} parent=27 // pred_fallthru
          _
        // Predicated region
        $region73: #{seq_forward.1} parent=27 // pred_check
          %p676 = pneg %p422
        $region74: #{seq_forward.1} parent=27 // pred_check_branch
          %678 = sbr.rel (%p676) target = $region76
        $region75: #{seq_forward.1} parent=27 // pred_region
          %p679 = scmp.lt.s32.totalorder %s34, 1
          %s680 = scalar_select %p679, %s34, 1
          %s681 = scalar_lea.vmem %s14, %s680
        $region76: #{seq_forward.1} parent=27 // pred_fallthru
          _
        // Predicated region
        $region77: #{seq_forward.1} parent=27 // pred_check
          %p682 = pneg %p448
        $region78: #{seq_forward.1} parent=27 // pred_check_branch
          %684 = sbr.rel (%p682) target = $region80
        $region79: #{seq_forward.1} parent=27 // pred_region
          %p685 = scmp.lt.s32.totalorder %s34, 1
          %s686 = scalar_select %p685, %s34, 1
          %s687 = smul.addr %s686, 4
          %s688 = smul.addr %s687, 4
          %s689 = scalar_lea.vmem %s15, %s688
        $region80: #{seq_forward.1} parent=27 // pred_fallthru
          _
        // Predicated region
        $region81: #{seq_forward.1} parent=27 // pred_check
          %p690 = pneg %p474
        $region82: #{seq_forward.1} parent=27 // pred_check_branch
          %692 = sbr.rel (%p690) target = $region84
        $region83: #{seq_forward.1} parent=27 // pred_region
          %p693 = scmp.lt.s32.totalorder %s34, 1
          %s694 = scalar_select %p693, %s34, 1
          %s695 = scalar_lea.vmem %s16, %s694
        $region84: #{seq_forward.1} parent=27 // pred_fallthru
          _
        // Predicated region
        $region85: #{seq_forward.1} parent=27 // pred_check
          %p696 = pneg %p500
        $region86: #{seq_forward.1} parent=27 // pred_check_branch
          %698 = sbr.rel (%p696) target = $region88
        $region87: #{seq_forward.1} parent=27 // pred_region
          %p699 = scmp.lt.s32.totalorder %s34, 1
          %s700 = scalar_select %p699, %s34, 1
          %s701 = smul.addr %s700, 8
          %s702 = smul.addr %s701, 4
          %s703 = scalar_lea.vmem %s17, %s702
        $region88: #{seq_forward.1} parent=27 // pred_fallthru
          _
        // Predicated region
        $region89: #{seq_forward.1} parent=27 // pred_check
          %p704 = pneg %p526
        $region90: #{seq_forward.1} parent=27 // pred_check_branch
          %706 = sbr.rel (%p704) target = $region92
        $region91: #{seq_forward.1} parent=27 // pred_region
          %p707 = scmp.lt.s32.totalorder %s34, 1
          %s708 = scalar_select %p707, %s34, 1
          %s709 = scalar_lea.vmem %s18, %s708
        $region92: #{seq_forward.1} parent=27 // pred_fallthru
          _
      $region28: #{seq_forward.1} parent=5 // pred_fallthru
        _
      %p710 = scmp.le.s32.totalorder 1, %s26
      %p711 = scmp.lt.s32.totalorder %s26, 3
      %p712 = pnand %p710, %p711
      %p713 = pneg %p712
      // Predicated region
      $region93: #{seq_forward.1} parent=5 // pred_check
        _
      $region94: #{seq_forward.1} parent=5 // pred_check_branch
        %715 = sbr.rel (%p712) target = $region96
      $region95: #{seq_forward.1} parent=5 // pred_region
        %s716 = ssub.s32 %s26, 1
        %s717 = smul.u32 4, %s35
        %p718 = scmp.lt.s32.totalorder %s717, 3
        %s719 = scalar_select %p718, %s717, 3
        %s720 = smul.addr %s719, 8
        %s721 = scalar_lea.vmem %s0, %s720
        %p722 = pneg %p64
        %p723 = pneg %p61
        %p724 = scmp.lt.s32.totalorder %s35, 0
        %s725 = scalar_select %p724, %s35, 0
        %s726 = smul.addr %s725, 4
        %s727 = scalar_lea.vmem %s1, %s726
        %p728 = pneg %p90
        %p729 = pneg %p87
        %s730 = smul.u32 4, %s35
        %p731 = scmp.lt.s32.totalorder %s730, 3
        %s732 = scalar_select %p731, %s730, 3
        %s733 = smul.addr %s732, 8
        %s734 = scalar_lea.vmem %s2, %s733
        %p735 = pneg %p116
        %p736 = pneg %p113
        %p737 = scmp.lt.s32.totalorder %s36, 1
        %s738 = scalar_select %p737, %s36, 1
        %s739 = smul.addr %s738, 4
        %s740 = smul.addr %s739, 4
        %s741 = scalar_lea.vmem %s3, %s740
        %p742 = pneg %p142
        %p743 = pneg %p139
        %p744 = scmp.lt.s32.totalorder %s36, 1
        %s745 = scalar_select %p744, %s36, 1
        %s746 = scalar_lea.vmem %s4, %s745
        %p747 = pneg %p168
        %p748 = pneg %p165
        %p749 = scmp.lt.s32.totalorder %s36, 1
        %s750 = scalar_select %p749, %s36, 1
        %s751 = smul.addr %s750, 4
        %s752 = smul.addr %s751, 4
        %s753 = scalar_lea.vmem %s5, %s752
        %p754 = pneg %p194
        %p755 = pneg %p191
        %p756 = scmp.lt.s32.totalorder %s36, 1
        %s757 = scalar_select %p756, %s36, 1
        %s758 = scalar_lea.vmem %s6, %s757
        %p759 = pneg %p220
        %p760 = pneg %p217
        %p761 = scmp.lt.s32.totalorder %s36, 1
        %s762 = scalar_select %p761, %s36, 1
        %s763 = smul.addr %s762, 4
        %s764 = smul.addr %s763, 4
        %s765 = scalar_lea.vmem %s7, %s764
        %p766 = pneg %p246
        %p767 = pneg %p243
        %p768 = scmp.lt.s32.totalorder %s36, 1
        %s769 = scalar_select %p768, %s36, 1
        %s770 = scalar_lea.vmem %s8, %s769
        %p771 = pneg %p272
        %p772 = pneg %p269
        %p773 = scmp.lt.s32.totalorder %s36, 1
        %s774 = scalar_select %p773, %s36, 1
        %s775 = smul.addr %s774, 4
        %s776 = smul.addr %s775, 4
        %s777 = scalar_lea.vmem %s9, %s776
        %p778 = pneg %p298
        %p779 = pneg %p295
        %p780 = scmp.lt.s32.totalorder %s36, 1
        %s781 = scalar_select %p780, %s36, 1
        %s782 = scalar_lea.vmem %s10, %s781
        %p783 = pneg %p324
        %p784 = pneg %p321
        %p785 = scmp.lt.s32.totalorder %s36, 1
        %s786 = scalar_select %p785, %s36, 1
        %s787 = scalar_lea.vmem %s11, %s786
        %p788 = pneg %p350
        %p789 = pneg %p347
        %p790 = scmp.lt.s32.totalorder %s36, 1
        %s791 = scalar_select %p790, %s36, 1
        %s792 = scalar_lea.vmem %s12, %s791
        %p793 = pneg %p376
        %p794 = pneg %p373
        %p795 = scmp.lt.s32.totalorder %s36, 1
        %s796 = scalar_select %p795, %s36, 1
        %s797 = scalar_lea.vmem %s13, %s796
        %p798 = pneg %p402
        %p799 = pneg %p399
        %p800 = scmp.lt.s32.totalorder %s36, 1
        %s801 = scalar_select %p800, %s36, 1
        %s802 = scalar_lea.vmem %s14, %s801
        %p803 = pneg %p428
        %p804 = pneg %p425
        %p805 = scmp.lt.s32.totalorder %s36, 1
        %s806 = scalar_select %p805, %s36, 1
        %s807 = smul.addr %s806, 4
        %s808 = smul.addr %s807, 4
        %s809 = scalar_lea.vmem %s15, %s808
        %p810 = pneg %p454
        %p811 = pneg %p451
        %p812 = scmp.lt.s32.totalorder %s36, 1
        %s813 = scalar_select %p812, %s36, 1
        %s814 = scalar_lea.vmem %s16, %s813
        %p815 = pneg %p480
        %p816 = pneg %p477
        %p817 = scmp.lt.s32.totalorder %s36, 1
        %s818 = scalar_select %p817, %s36, 1
        %s819 = smul.addr %s818, 8
        %s820 = smul.addr %s819, 4
        %s821 = scalar_lea.vmem %s17, %s820
        %p822 = pneg %p506
        %p823 = pneg %p503
        %p824 = scmp.lt.s32.totalorder %s36, 1
        %s825 = scalar_select %p824, %s36, 1
        %s826 = scalar_lea.vmem %s18, %s825
        %p827 = pneg %p532
        %p828 = pneg %p529
        %p829 = pneg %p558
        %p830 = pneg %p555
        %s831 = smul.u32 4, %s35
        %p832 = scmp.lt.s32.totalorder %s831, 3
        %s833 = scalar_select %p832, %s831, 3
        %s834 = smul.addr %s833, 8
        %s835 = scalar_lea.vmem %s0, %s834
        %s836 = smul.u32 4, %s35
        %p837 = scmp.lt.s32.totalorder %s35, 0
        %s838 = scalar_select %p837, %s35, 0
        %s839 = smul.addr %s838, 4
        %s840 = scalar_lea.vmem %s1, %s839
        %s841 = smul.u32 4, %s35
        %p842 = scmp.lt.s32.totalorder %s841, 3
        %s843 = scalar_select %p842, %s841, 3
        %s844 = smul.addr %s843, 8
        %s845 = scalar_lea.vmem %s2, %s844
        %s846 = smul.u32 4, %s35
        %p847 = scmp.lt.s32.totalorder %s36, 1
        %s848 = scalar_select %p847, %s36, 1
        %s849 = smul.addr %s848, 4
        %s850 = smul.addr %s849, 4
        %s851 = scalar_lea.vmem %s3, %s850
        %p852 = scmp.lt.s32.totalorder %s36, 1
        %s853 = scalar_select %p852, %s36, 1
        %s854 = scalar_lea.vmem %s4, %s853
        %p855 = scmp.lt.s32.totalorder %s36, 1
        %s856 = scalar_select %p855, %s36, 1
        %s857 = smul.addr %s856, 4
        %s858 = smul.addr %s857, 4
        %s859 = scalar_lea.vmem %s5, %s858
        %p860 = scmp.lt.s32.totalorder %s36, 1
        %s861 = scalar_select %p860, %s36, 1
        %s862 = scalar_lea.vmem %s6, %s861
        %p863 = scmp.lt.s32.totalorder %s36, 1
        %s864 = scalar_select %p863, %s36, 1
        %s865 = smul.addr %s864, 4
        %s866 = smul.addr %s865, 4
        %s867 = scalar_lea.vmem %s7, %s866
        %p868 = scmp.lt.s32.totalorder %s36, 1
        %s869 = scalar_select %p868, %s36, 1
        %s870 = scalar_lea.vmem %s8, %s869
        %p871 = scmp.lt.s32.totalorder %s36, 1
        %s872 = scalar_select %p871, %s36, 1
        %s873 = smul.addr %s872, 4
        %s874 = smul.addr %s873, 4
        %s875 = scalar_lea.vmem %s9, %s874
        %p876 = scmp.lt.s32.totalorder %s36, 1
        %s877 = scalar_select %p876, %s36, 1
        %s878 = scalar_lea.vmem %s10, %s877
        %p879 = scmp.lt.s32.totalorder %s36, 1
        %s880 = scalar_select %p879, %s36, 1
        %s881 = scalar_lea.vmem %s11, %s880
        %p882 = scmp.lt.s32.totalorder %s36, 1
        %s883 = scalar_select %p882, %s36, 1
        %s884 = scalar_lea.vmem %s12, %s883
        %p885 = scmp.lt.s32.totalorder %s36, 1
        %s886 = scalar_select %p885, %s36, 1
        %s887 = scalar_lea.vmem %s13, %s886
        %p888 = scmp.lt.s32.totalorder %s36, 1
        %s889 = scalar_select %p888, %s36, 1
        %s890 = scalar_lea.vmem %s14, %s889
        %p891 = scmp.lt.s32.totalorder %s36, 1
        %s892 = scalar_select %p891, %s36, 1
        %s893 = smul.addr %s892, 4
        %s894 = smul.addr %s893, 4
        %s895 = scalar_lea.vmem %s15, %s894
        %p896 = scmp.lt.s32.totalorder %s36, 1
        %s897 = scalar_select %p896, %s36, 1
        %s898 = scalar_lea.vmem %s16, %s897
        %p899 = scmp.lt.s32.totalorder %s36, 1
        %s900 = scalar_select %p899, %s36, 1
        %s901 = smul.addr %s900, 8
        %s902 = smul.addr %s901, 4
        %s903 = scalar_lea.vmem %s17, %s902
        %p904 = scmp.lt.s32.totalorder %s36, 1
        %s905 = scalar_select %p904, %s36, 1
        %s906 = scalar_lea.vmem %s18, %s905
        %s907 = smul.u32 4, %s35
        %p909 = scmp.eq.s32.totalorder %s36, 0
        // Predicated region
        $region97: #{seq_forward.1} parent=95 // pred_check
          %p910 = pneg %p909
        $region98: #{seq_forward.1} parent=95 // pred_check_branch
          %912 = sbr.rel (%p910) target = $region100
        $region99: #{seq_forward.1} parent=95 // pred_region
          %v913 = vld [vmem:[%s835] sm:$0xff]
          %v914 = vld [vmem:[%s835 + $0x8] sm:$0xff]
          %v915 = vld [vmem:[%s835 + $0x10] sm:$0xff]
          %v916 = vld [vmem:[%s835 + $0x18] sm:$0xff]
          %vm917 = vcmask 261120
          %918 = vst.msk [vmem:[#allocation2] sm:$0xff] %vm917, %v913
          %919 = vst.msk [vmem:[#allocation2 + $0x8] sm:$0xff] %vm917, %v914
          %920 = vst.msk [vmem:[#allocation2 + $0x10] sm:$0xff] %vm917, %v915
          %921 = vst.msk [vmem:[#allocation2 + $0x18] sm:$0xff] %vm917, %v916
        $region100: #{seq_forward.1} parent=95 // pred_fallthru
          _
        %v922 = vld [vmem:[#allocation2] sm:$0xff]
        %v923 = vld [vmem:[#allocation2 + $0x8] sm:$0xff]
        %v924 = vld [vmem:[#allocation2 + $0x10] sm:$0xff]
        %v925 = vld [vmem:[#allocation2 + $0x18] sm:$0xff]
        %v926 = vpack.c.bf16 %v923, %v922
        %v927 = vpack.c.bf16 %v925, %v924
        %v928 = vld [vmem:[%s840] sm:$0xf]
        %v930 = vrot.slane %v928, 1
        %v931 = vrot.slane %v928, 2
        %v932 = vrot.slane %v928, 3
        %v933 = vperm.slane %v928, 0
        %v934 = vperm.slane %v930, 0
        %v935 = vperm.slane %v931, 0
        %v936 = vperm.slane %v932, 0
        %v941 = vld [vmem:[%s851] sm:$0xf]
        %v942 = vld [vmem:[%s851 + $0x4] sm:$0xf]
        %v943 = vld [vmem:[%s851 + $0x8] sm:$0xf]
        %v944 = vld [vmem:[%s851 + $0xc] sm:$0xf]
        %v945 = vld [vmem:[%s854] sm:$0x1]
        %v947 = vperm.slane %v945, 0
        %v953 = vunpack.c.l.b16 %v941
        %v954 = vunpack.c.l.b16 %v942
        %v955 = vunpack.c.l.b16 %v943
        %v956 = vunpack.c.l.b16 %v944
        %v957 = vpack.c.b16 %v954, %v953
        %v958 = vpack.c.b16 %v956, %v955
        %vm961 = vcmask 261120
        %v963 = vsel %vm961, %v926, 0
        %v966 = vsel %vm961, %v927, 0
        %968 = vmatpush.bf16.msra.mxu0 0
        %969 = vmatpush.bf16.msra.mxu0 0
        %970 = vmatpush.bf16.msra.mxu0 0
        %971 = vmatpush.bf16.msra.mxu0 0
        %972 = vmatpush.bf16.msra.mxu0 0
        %973 = vmatpush.bf16.msra.mxu0 0
        %974 = vmatpush.bf16.msra.mxu0 %v958
        %975 = vmatpush.bf16.msra.mxu0 %v957
        %976 = vmatmul.bf16.gmra.mxu0 %v963
        %v977 = vpop.f32.mrf.mxu0
        %v978 = vadd.f32 %v947, %v977
        %v979 = vpop.f32.mrf.mxu0
        %v980 = vadd.f32 %v947, %v979
        %981 = vmatmul.bf16.gmra.mxu0 %v966
        %v982 = vpop.f32.mrf.mxu0
        %v983 = vadd.f32 %v947, %v982
        %v984 = vpop.f32.mrf.mxu0
        %v985 = vadd.f32 %v947, %v984
        %986 = vdwg.mxu0
        %v987 = vmul.f32 %v978, 0.35355338
        %v988 = vmul.f32 %v980, 0.35355338
        %v989 = vmul.f32 %v983, 0.35355338
        %v990 = vmul.f32 %v985, 0.35355338
        %v991 = vld [vmem:[%s859] sm:$0xf]
        %v992 = vld [vmem:[%s859 + $0x4] sm:$0xf]
        %v993 = vld [vmem:[%s859 + $0x8] sm:$0xf]
        %v994 = vld [vmem:[%s859 + $0xc] sm:$0xf]
        %v995 = vld [vmem:[%s862] sm:$0x1]
        %v997 = vperm.slane %v995, 0
        %v1003 = vunpack.c.l.b16 %v991
        %v1004 = vunpack.c.l.b16 %v992
        %v1005 = vunpack.c.l.b16 %v993
        %v1006 = vunpack.c.l.b16 %v994
        %v1007 = vpack.c.b16 %v1004, %v1003
        %v1008 = vpack.c.b16 %v1006, %v1005
        %1011 = vmatpush.bf16.msra.mxu0 0
        %1012 = vmatpush.bf16.msra.mxu0 0
        %1013 = vmatpush.bf16.msra.mxu0 0
        %1014 = vmatpush.bf16.msra.mxu0 0
        %1015 = vmatpush.bf16.msra.mxu0 0
        %1016 = vmatpush.bf16.msra.mxu0 0
        %1017 = vmatpush.bf16.msra.mxu0 %v1008
        %1018 = vmatpush.bf16.msra.mxu0 %v1007
        %1019 = vmatmul.bf16.gmra.mxu0 %v963
        %v1020 = vpop.f32.mrf.mxu0
        %v1021 = vadd.f32 %v997, %v1020
        %v1022 = vpop.f32.mrf.mxu0
        %v1023 = vadd.f32 %v997, %v1022
        %1024 = vmatmul.bf16.gmra.mxu0 %v966
        %v1025 = vpop.f32.mrf.mxu0
        %v1026 = vadd.f32 %v997, %v1025
        %v1027 = vpop.f32.mrf.mxu0
        %v1028 = vadd.f32 %v997, %v1027
        %1029 = vdwg.mxu0
        %v1030 = vld [vmem:[%s867] sm:$0xf]
        %v1031 = vld [vmem:[%s867 + $0x4] sm:$0xf]
        %v1032 = vld [vmem:[%s867 + $0x8] sm:$0xf]
        %v1033 = vld [vmem:[%s867 + $0xc] sm:$0xf]
        %v1034 = vld [vmem:[%s870] sm:$0x1]
        %v1036 = vperm.slane %v1034, 0
        %v1042 = vunpack.c.l.b16 %v1030
        %v1043 = vunpack.c.l.b16 %v1031
        %v1044 = vunpack.c.l.b16 %v1032
        %v1045 = vunpack.c.l.b16 %v1033
        %v1046 = vpack.c.b16 %v1043, %v1042
        %v1047 = vpack.c.b16 %v1045, %v1044
        %1050 = vmatpush.bf16.msra.mxu0 0
        %1051 = vmatpush.bf16.msra.mxu0 0
        %1052 = vmatpush.bf16.msra.mxu0 0
        %1053 = vmatpush.bf16.msra.mxu0 0
        %1054 = vmatpush.bf16.msra.mxu0 0
        %1055 = vmatpush.bf16.msra.mxu0 0
        %1056 = vmatpush.bf16.msra.mxu0 %v1047
        %1057 = vmatpush.bf16.msra.mxu0 %v1046
        %1058 = vmatmul.bf16.gmra.mxu0 %v963
        %v1059 = vpop.f32.mrf.mxu0
        %v1060 = vadd.f32 %v1036, %v1059
        %v1061 = vpop.f32.mrf.mxu0
        %v1062 = vadd.f32 %v1036, %v1061
        %1063 = vmatmul.bf16.gmra.mxu0 %v966
        %v1064 = vpop.f32.mrf.mxu0
        %v1065 = vadd.f32 %v1036, %v1064
        %v1066 = vpop.f32.mrf.mxu0
        %v1067 = vadd.f32 %v1036, %v1066
        %1068 = vdwg.mxu0
        %v1069 = vpack.c.bf16 %v987, %v987
        %v1070 = vpack.c.bf16 %v988, %v988
        %v1071 = vpack.c.bf16 %v989, %v989
        %v1072 = vpack.c.bf16 %v990, %v990
        %v1073 = vpack.c.bf16 %v1021, %v1021
        %v1074 = vpack.c.bf16 %v1023, %v1023
        %v1075 = vpack.c.bf16 %v1026, %v1026
        %v1076 = vpack.c.bf16 %v1028, %v1028
        %v1077 = vpack.c.bf16 %v1060, %v1060
        %v1078 = vpack.c.bf16 %v1062, %v1062
        %v1079 = vpack.c.bf16 %v1065, %v1065
        %v1080 = vpack.c.bf16 %v1067, %v1067
        %vm1081 = vcmask 64512
        %v1083 = vsel %vm1081, %v1069, 0
        %v1086 = vsel %vm1081, %v1073, 0
        %1088 = vmatpush.bf16.xpose.msra.mxu0 0
        %1089 = vmatpush.bf16.xpose.msra.mxu0 0
        %1090 = vmatpush.bf16.xpose.msra.mxu0 0
        %1091 = vmatpush.bf16.xpose.msra.mxu0 0
        %1092 = vmatpush.bf16.xpose.msra.mxu0 0
        %1093 = vmatpush.bf16.xpose.msra.mxu0 0
        %1094 = vmatpush.bf16.xpose.msra.mxu0 0
        %1095 = vmatpush.bf16.xpose.msra.mxu0 %v1086
        %1096 = vmatmul.bf16.gmra.mxu0 %v1083
        %v1097 = vpop.f32.mrf.mxu0
        %v1098 = vadd.f32 %v933, %v1097
        %v1099 = vpop.f32.mrf.mxu0
        %1100 = vdwg.mxu0
        %v1102 = vsel %vm1081, %v1070, 0
        %v1105 = vsel %vm1081, %v1074, 0
        %1107 = vmatpush.bf16.xpose.msra.mxu0 0
        %1108 = vmatpush.bf16.xpose.msra.mxu0 0
        %1109 = vmatpush.bf16.xpose.msra.mxu0 0
        %1110 = vmatpush.bf16.xpose.msra.mxu0 0
        %1111 = vmatpush.bf16.xpose.msra.mxu0 0
        %1112 = vmatpush.bf16.xpose.msra.mxu0 0
        %1113 = vmatpush.bf16.xpose.msra.mxu0 0
        %1114 = vmatpush.bf16.xpose.msra.mxu0 %v1105
        %1115 = vmatmul.bf16.gmra.mxu0 %v1102
        %v1116 = vpop.f32.mrf.mxu0
        %v1117 = vadd.f32 %v934, %v1116
        %v1118 = vpop.f32.mrf.mxu0
        %1119 = vdwg.mxu0
        %v1121 = vsel %vm1081, %v1071, 0
        %v1124 = vsel %vm1081, %v1075, 0
        %1126 = vmatpush.bf16.xpose.msra.mxu0 0
        %1127 = vmatpush.bf16.xpose.msra.mxu0 0
        %1128 = vmatpush.bf16.xpose.msra.mxu0 0
        %1129 = vmatpush.bf16.xpose.msra.mxu0 0
        %1130 = vmatpush.bf16.xpose.msra.mxu0 0
        %1131 = vmatpush.bf16.xpose.msra.mxu0 0
        %1132 = vmatpush.bf16.xpose.msra.mxu0 0
        %1133 = vmatpush.bf16.xpose.msra.mxu0 %v1124
        %1134 = vmatmul.bf16.gmra.mxu0 %v1121
        %v1135 = vpop.f32.mrf.mxu0
        %v1136 = vadd.f32 %v935, %v1135
        %v1137 = vpop.f32.mrf.mxu0
        %1138 = vdwg.mxu0
        %v1140 = vsel %vm1081, %v1072, 0
        %v1143 = vsel %vm1081, %v1076, 0
        %1145 = vmatpush.bf16.xpose.msra.mxu0 0
        %1146 = vmatpush.bf16.xpose.msra.mxu0 0
        %1147 = vmatpush.bf16.xpose.msra.mxu0 0
        %1148 = vmatpush.bf16.xpose.msra.mxu0 0
        %1149 = vmatpush.bf16.xpose.msra.mxu0 0
        %1150 = vmatpush.bf16.xpose.msra.mxu0 0
        %1151 = vmatpush.bf16.xpose.msra.mxu0 0
        %1152 = vmatpush.bf16.xpose.msra.mxu0 %v1143
        %1153 = vmatmul.bf16.gmra.mxu0 %v1140
        %v1154 = vpop.f32.mrf.mxu0
        %v1155 = vadd.f32 %v936, %v1154
        %v1156 = vpop.f32.mrf.mxu0
        %1157 = vdwg.mxu0
        %v1158 = vsel %vm1081, %v1098, -inf
        %1159 = vmax.xlane.f32.xlu0 %v1158
        %v1160 = vpop.xlane.xlu0 %1159
        %v1161 = vsel %vm1081, %v1117, -inf
        %1162 = vmax.xlane.f32.xlu0 %v1161
        %v1163 = vpop.xlane.xlu0 %1162
        %v1164 = vsel %vm1081, %v1136, -inf
        %1165 = vmax.xlane.f32.xlu0 %v1164
        %v1166 = vpop.xlane.xlu0 %1165
        %v1167 = vsel %vm1081, %v1155, -inf
        %1168 = vmax.xlane.f32.xlu0 %v1167
        %v1169 = vpop.xlane.xlu0 %1168
        %v1170 = vsub.f32 %v1098, %v1160
        %v1171 = vsub.f32 %v1117, %v1163
        %v1172 = vsub.f32 %v1136, %v1166
        %v1173 = vsub.f32 %v1155, %v1169
        %v1174 = vmul.f32 %v1170, 1.442695
        %v1175 = vpow.pop %v1174
        %v1176 = vmul.f32 %v1171, 1.442695
        %v1177 = vpow.pop %v1176
        %v1178 = vmul.f32 %v1172, 1.442695
        %v1179 = vpow.pop %v1178
        %v1180 = vmul.f32 %v1173, 1.442695
        %v1181 = vpow.pop %v1180
        %v1182 = vsel %vm1081, %v1175, 0.0
        %1183 = vadd.xlane.f32.xlu0 %v1182
        %v1184 = vpop.xlane.xlu0 %1183
        %v1185 = vsel %vm1081, %v1177, 0.0
        %1186 = vadd.xlane.f32.xlu0 %v1185
        %v1187 = vpop.xlane.xlu0 %1186
        %v1188 = vsel %vm1081, %v1179, 0.0
        %1189 = vadd.xlane.f32.xlu0 %v1188
        %v1190 = vpop.xlane.xlu0 %1189
        %v1191 = vsel %vm1081, %v1181, 0.0
        %1192 = vadd.xlane.f32.xlu0 %v1191
        %v1193 = vpop.xlane.xlu0 %1192
        %v1194 = vrcp.pop %v1184
        %v1195 = vrcp.pop %v1187
        %v1196 = vrcp.pop %v1190
        %v1197 = vrcp.pop %v1193
        %v1198 = vmul.f32 %v1175, %v1194
        %v1199 = vmul.f32 %v1177, %v1195
        %v1200 = vmul.f32 %v1179, %v1196
        %v1201 = vmul.f32 %v1181, %v1197
        %v1202 = vpack.c.bf16 %v1198, %v1198
        %v1203 = vpack.c.bf16 %v1199, %v1199
        %v1204 = vpack.c.bf16 %v1200, %v1200
        %v1205 = vpack.c.bf16 %v1201, %v1201
        %v1207 = vsel %vm1081, %v1202, 0
        %vm1209 = vcmask 1043456
        %v1211 = vsel %vm1209, %v1077, 0
        %1213 = vmatpush.bf16.msra.mxu0 0
        %1214 = vmatpush.bf16.msra.mxu0 0
        %1215 = vmatpush.bf16.msra.mxu0 0
        %1216 = vmatpush.bf16.msra.mxu0 0
        %1217 = vmatpush.bf16.msra.mxu0 0
        %1218 = vmatpush.bf16.msra.mxu0 0
        %1219 = vmatpush.bf16.msra.mxu0 0
        %1220 = vmatpush.bf16.msra.mxu0 %v1211
        %1221 = vmatmul.bf16.gmra.mxu0 %v1207
        %v1222 = vpop.f32.mrf.mxu0
        %v1223 = vadd.f32 0.0, %v1222
        %v1224 = vpop.f32.mrf.mxu0
        %1225 = vdwg.mxu0
        %v1227 = vsel %vm1081, %v1203, 0
        %v1230 = vsel %vm1209, %v1078, 0
        %1232 = vmatpush.bf16.msra.mxu0 0
        %1233 = vmatpush.bf16.msra.mxu0 0
        %1234 = vmatpush.bf16.msra.mxu0 0
        %1235 = vmatpush.bf16.msra.mxu0 0
        %1236 = vmatpush.bf16.msra.mxu0 0
        %1237 = vmatpush.bf16.msra.mxu0 0
        %1238 = vmatpush.bf16.msra.mxu0 0
        %1239 = vmatpush.bf16.msra.mxu0 %v1230
        %1240 = vmatmul.bf16.gmra.mxu0 %v1227
        %v1241 = vpop.f32.mrf.mxu0
        %v1242 = vadd.f32 0.0, %v1241
        %v1243 = vpop.f32.mrf.mxu0
        %1244 = vdwg.mxu0
        %v1246 = vsel %vm1081, %v1204, 0
        %v1249 = vsel %vm1209, %v1079, 0
        %1251 = vmatpush.bf16.msra.mxu0 0
        %1252 = vmatpush.bf16.msra.mxu0 0
        %1253 = vmatpush.bf16.msra.mxu0 0
        %1254 = vmatpush.bf16.msra.mxu0 0
        %1255 = vmatpush.bf16.msra.mxu0 0
        %1256 = vmatpush.bf16.msra.mxu0 0
        %1257 = vmatpush.bf16.msra.mxu0 0
        %1258 = vmatpush.bf16.msra.mxu0 %v1249
        %1259 = vmatmul.bf16.gmra.mxu0 %v1246
        %v1260 = vpop.f32.mrf.mxu0
        %v1261 = vadd.f32 0.0, %v1260
        %v1262 = vpop.f32.mrf.mxu0
        %1263 = vdwg.mxu0
        %v1265 = vsel %vm1081, %v1205, 0
        %v1268 = vsel %vm1209, %v1080, 0
        %1270 = vmatpush.bf16.msra.mxu0 0
        %1271 = vmatpush.bf16.msra.mxu0 0
        %1272 = vmatpush.bf16.msra.mxu0 0
        %1273 = vmatpush.bf16.msra.mxu0 0
        %1274 = vmatpush.bf16.msra.mxu0 0
        %1275 = vmatpush.bf16.msra.mxu0 0
        %1276 = vmatpush.bf16.msra.mxu0 0
        %1277 = vmatpush.bf16.msra.mxu0 %v1268
        %1278 = vmatmul.bf16.gmra.mxu0 %v1265
        %v1279 = vpop.f32.mrf.mxu0
        %v1280 = vadd.f32 0.0, %v1279
        %v1281 = vpop.f32.mrf.mxu0
        %1282 = vdwg.mxu0
        %v1284 = vunpack.c.l.b16 %v1069
        %v1285 = vpack.c.b16 %v1284, %v1284
        %1286 = vrot.lane.b32.xlu0 %v1285, 120
        %v1287 = vpop.permute.xlu0 %1286
        %v1289 = vunpack.c.l.b16 %v1073
        %v1290 = vpack.c.b16 %v1289, %v1289
        %1291 = vrot.lane.b32.xlu0 %v1290, 120
        %v1292 = vpop.permute.xlu0 %1291
        %v1294 = vsel %vm1081, %v1287, 0
        %v1297 = vsel %vm1081, %v1292, 0
        %1299 = vmatpush.bf16.xpose.msra.mxu0 0
        %1300 = vmatpush.bf16.xpose.msra.mxu0 0
        %1301 = vmatpush.bf16.xpose.msra.mxu0 0
        %1302 = vmatpush.bf16.xpose.msra.mxu0 0
        %1303 = vmatpush.bf16.xpose.msra.mxu0 0
        %1304 = vmatpush.bf16.xpose.msra.mxu0 0
        %1305 = vmatpush.bf16.xpose.msra.mxu0 0
        %1306 = vmatpush.bf16.xpose.msra.mxu0 %v1297
        %1307 = vmatmul.bf16.gmra.mxu0 %v1294
        %v1308 = vpop.f32.mrf.mxu0
        %v1309 = vadd.f32 %v933, %v1308
        %v1310 = vpop.f32.mrf.mxu0
        %1311 = vdwg.mxu0
        %v1313 = vunpack.c.l.b16 %v1070
        %v1314 = vpack.c.b16 %v1313, %v1313
        %1315 = vrot.lane.b32.xlu0 %v1314, 120
        %v1316 = vpop.permute.xlu0 %1315
        %v1318 = vunpack.c.l.b16 %v1074
        %v1319 = vpack.c.b16 %v1318, %v1318
        %1320 = vrot.lane.b32.xlu0 %v1319, 120
        %v1321 = vpop.permute.xlu0 %1320
        %v1323 = vsel %vm1081, %v1316, 0
        %v1326 = vsel %vm1081, %v1321, 0
        %1328 = vmatpush.bf16.xpose.msra.mxu0 0
        %1329 = vmatpush.bf16.xpose.msra.mxu0 0
        %1330 = vmatpush.bf16.xpose.msra.mxu0 0
        %1331 = vmatpush.bf16.xpose.msra.mxu0 0
        %1332 = vmatpush.bf16.xpose.msra.mxu0 0
        %1333 = vmatpush.bf16.xpose.msra.mxu0 0
        %1334 = vmatpush.bf16.xpose.msra.mxu0 0
        %1335 = vmatpush.bf16.xpose.msra.mxu0 %v1326
        %1336 = vmatmul.bf16.gmra.mxu0 %v1323
        %v1337 = vpop.f32.mrf.mxu0
        %v1338 = vadd.f32 %v934, %v1337
        %v1339 = vpop.f32.mrf.mxu0
        %1340 = vdwg.mxu0
        %v1342 = vunpack.c.l.b16 %v1071
        %v1343 = vpack.c.b16 %v1342, %v1342
        %1344 = vrot.lane.b32.xlu0 %v1343, 120
        %v1345 = vpop.permute.xlu0 %1344
        %v1347 = vunpack.c.l.b16 %v1075
        %v1348 = vpack.c.b16 %v1347, %v1347
        %1349 = vrot.lane.b32.xlu0 %v1348, 120
        %v1350 = vpop.permute.xlu0 %1349
        %v1352 = vsel %vm1081, %v1345, 0
        %v1355 = vsel %vm1081, %v1350, 0
        %1357 = vmatpush.bf16.xpose.msra.mxu0 0
        %1358 = vmatpush.bf16.xpose.msra.mxu0 0
        %1359 = vmatpush.bf16.xpose.msra.mxu0 0
        %1360 = vmatpush.bf16.xpose.msra.mxu0 0
        %1361 = vmatpush.bf16.xpose.msra.mxu0 0
        %1362 = vmatpush.bf16.xpose.msra.mxu0 0
        %1363 = vmatpush.bf16.xpose.msra.mxu0 0
        %1364 = vmatpush.bf16.xpose.msra.mxu0 %v1355
        %1365 = vmatmul.bf16.gmra.mxu0 %v1352
        %v1366 = vpop.f32.mrf.mxu0
        %v1367 = vadd.f32 %v935, %v1366
        %v1368 = vpop.f32.mrf.mxu0
        %1369 = vdwg.mxu0
        %v1371 = vunpack.c.l.b16 %v1072
        %v1372 = vpack.c.b16 %v1371, %v1371
        %1373 = vrot.lane.b32.xlu0 %v1372, 120
        %v1374 = vpop.permute.xlu0 %1373
        %v1376 = vunpack.c.l.b16 %v1076
        %v1377 = vpack.c.b16 %v1376, %v1376
        %1378 = vrot.lane.b32.xlu0 %v1377, 120
        %v1379 = vpop.permute.xlu0 %1378
        %v1381 = vsel %vm1081, %v1374, 0
        %v1384 = vsel %vm1081, %v1379, 0
        %1386 = vmatpush.bf16.xpose.msra.mxu0 0
        %1387 = vmatpush.bf16.xpose.msra.mxu0 0
        %1388 = vmatpush.bf16.xpose.msra.mxu0 0
        %1389 = vmatpush.bf16.xpose.msra.mxu0 0
        %1390 = vmatpush.bf16.xpose.msra.mxu0 0
        %1391 = vmatpush.bf16.xpose.msra.mxu0 0
        %1392 = vmatpush.bf16.xpose.msra.mxu0 0
        %1393 = vmatpush.bf16.xpose.msra.mxu0 %v1384
        %1394 = vmatmul.bf16.gmra.mxu0 %v1381
        %v1395 = vpop.f32.mrf.mxu0
        %v1396 = vadd.f32 %v936, %v1395
        %v1397 = vpop.f32.mrf.mxu0
        %1398 = vdwg.mxu0
        %v1399 = vsel %vm1081, %v1309, -inf
        %1400 = vmax.xlane.f32.xlu0 %v1399
        %v1401 = vpop.xlane.xlu0 %1400
        %v1402 = vsel %vm1081, %v1338, -inf
        %1403 = vmax.xlane.f32.xlu0 %v1402
        %v1404 = vpop.xlane.xlu0 %1403
        %v1405 = vsel %vm1081, %v1367, -inf
        %1406 = vmax.xlane.f32.xlu0 %v1405
        %v1407 = vpop.xlane.xlu0 %1406
        %v1408 = vsel %vm1081, %v1396, -inf
        %1409 = vmax.xlane.f32.xlu0 %v1408
        %v1410 = vpop.xlane.xlu0 %1409
        %v1411 = vsub.f32 %v1309, %v1401
        %v1412 = vsub.f32 %v1338, %v1404
        %v1413 = vsub.f32 %v1367, %v1407
        %v1414 = vsub.f32 %v1396, %v1410
        %v1415 = vmul.f32 %v1411, 1.442695
        %v1416 = vpow.pop %v1415
        %v1417 = vmul.f32 %v1412, 1.442695
        %v1418 = vpow.pop %v1417
        %v1419 = vmul.f32 %v1413, 1.442695
        %v1420 = vpow.pop %v1419
        %v1421 = vmul.f32 %v1414, 1.442695
        %v1422 = vpow.pop %v1421
        %v1423 = vsel %vm1081, %v1416, 0.0
        %1424 = vadd.xlane.f32.xlu0 %v1423
        %v1425 = vpop.xlane.xlu0 %1424
        %v1426 = vsel %vm1081, %v1418, 0.0
        %1427 = vadd.xlane.f32.xlu0 %v1426
        %v1428 = vpop.xlane.xlu0 %1427
        %v1429 = vsel %vm1081, %v1420, 0.0
        %1430 = vadd.xlane.f32.xlu0 %v1429
        %v1431 = vpop.xlane.xlu0 %1430
        %v1432 = vsel %vm1081, %v1422, 0.0
        %1433 = vadd.xlane.f32.xlu0 %v1432
        %v1434 = vpop.xlane.xlu0 %1433
        %v1435 = vrcp.pop %v1425
        %v1436 = vrcp.pop %v1428
        %v1437 = vrcp.pop %v1431
        %v1438 = vrcp.pop %v1434
        %v1439 = vmul.f32 %v1416, %v1435
        %v1440 = vmul.f32 %v1418, %v1436
        %v1441 = vmul.f32 %v1420, %v1437
        %v1442 = vmul.f32 %v1422, %v1438
        %v1443 = vpack.c.bf16 %v1439, %v1439
        %v1444 = vpack.c.bf16 %v1440, %v1440
        %v1445 = vpack.c.bf16 %v1441, %v1441
        %v1446 = vpack.c.bf16 %v1442, %v1442
        %v1448 = vunpack.c.l.b16 %v1077
        %v1449 = vpack.c.b16 %v1448, %v1448
        %1450 = vrot.lane.b32.xlu0 %v1449, 120
        %v1451 = vpop.permute.xlu0 %1450
        %v1453 = vsel %vm1081, %v1443, 0
        %v1456 = vsel %vm1209, %v1451, 0
        %1458 = vmatpush.bf16.msra.mxu0 0
        %1459 = vmatpush.bf16.msra.mxu0 0
        %1460 = vmatpush.bf16.msra.mxu0 0
        %1461 = vmatpush.bf16.msra.mxu0 0
        %1462 = vmatpush.bf16.msra.mxu0 0
        %1463 = vmatpush.bf16.msra.mxu0 0
        %1464 = vmatpush.bf16.msra.mxu0 0
        %1465 = vmatpush.bf16.msra.mxu0 %v1456
        %1466 = vmatmul.bf16.gmra.mxu0 %v1453
        %v1467 = vpop.f32.mrf.mxu0
        %v1468 = vadd.f32 0.0, %v1467
        %v1469 = vpop.f32.mrf.mxu0
        %1470 = vdwg.mxu0
        %v1472 = vunpack.c.l.b16 %v1078
        %v1473 = vpack.c.b16 %v1472, %v1472
        %1474 = vrot.lane.b32.xlu0 %v1473, 120
        %v1475 = vpop.permute.xlu0 %1474
        %v1477 = vsel %vm1081, %v1444, 0
        %v1480 = vsel %vm1209, %v1475, 0
        %1482 = vmatpush.bf16.msra.mxu0 0
        %1483 = vmatpush.bf16.msra.mxu0 0
        %1484 = vmatpush.bf16.msra.mxu0 0
        %1485 = vmatpush.bf16.msra.mxu0 0
        %1486 = vmatpush.bf16.msra.mxu0 0
        %1487 = vmatpush.bf16.msra.mxu0 0
        %1488 = vmatpush.bf16.msra.mxu0 0
        %1489 = vmatpush.bf16.msra.mxu0 %v1480
        %1490 = vmatmul.bf16.gmra.mxu0 %v1477
        %v1491 = vpop.f32.mrf.mxu0
        %v1492 = vadd.f32 0.0, %v1491
        %v1493 = vpop.f32.mrf.mxu0
        %1494 = vdwg.mxu0
        %v1496 = vunpack.c.l.b16 %v1079
        %v1497 = vpack.c.b16 %v1496, %v1496
        %1498 = vrot.lane.b32.xlu0 %v1497, 120
        %v1499 = vpop.permute.xlu0 %1498
        %v1501 = vsel %vm1081, %v1445, 0
        %v1504 = vsel %vm1209, %v1499, 0
        %1506 = vmatpush.bf16.msra.mxu0 0
        %1507 = vmatpush.bf16.msra.mxu0 0
        %1508 = vmatpush.bf16.msra.mxu0 0
        %1509 = vmatpush.bf16.msra.mxu0 0
        %1510 = vmatpush.bf16.msra.mxu0 0
        %1511 = vmatpush.bf16.msra.mxu0 0
        %1512 = vmatpush.bf16.msra.mxu0 0
        %1513 = vmatpush.bf16.msra.mxu0 %v1504
        %1514 = vmatmul.bf16.gmra.mxu0 %v1501
        %v1515 = vpop.f32.mrf.mxu0
        %v1516 = vadd.f32 0.0, %v1515
        %v1517 = vpop.f32.mrf.mxu0
        %1518 = vdwg.mxu0
        %v1520 = vunpack.c.l.b16 %v1080
        %v1521 = vpack.c.b16 %v1520, %v1520
        %1522 = vrot.lane.b32.xlu0 %v1521, 120
        %v1523 = vpop.permute.xlu0 %1522
        %v1525 = vsel %vm1081, %v1446, 0
        %v1528 = vsel %vm1209, %v1523, 0
        %1530 = vmatpush.bf16.msra.mxu0 0
        %1531 = vmatpush.bf16.msra.mxu0 0
        %1532 = vmatpush.bf16.msra.mxu0 0
        %1533 = vmatpush.bf16.msra.mxu0 0
        %1534 = vmatpush.bf16.msra.mxu0 0
        %1535 = vmatpush.bf16.msra.mxu0 0
        %1536 = vmatpush.bf16.msra.mxu0 0
        %1537 = vmatpush.bf16.msra.mxu0 %v1528
        %1538 = vmatmul.bf16.gmra.mxu0 %v1525
        %v1539 = vpop.f32.mrf.mxu0
        %v1540 = vadd.f32 0.0, %v1539
        %v1541 = vpop.f32.mrf.mxu0
        %1542 = vdwg.mxu0
        %1543 = vrot.lane.b32.xlu0 %v1285, 112
        %v1544 = vpop.permute.xlu0 %1543
        %1545 = vrot.lane.b32.xlu0 %v1290, 112
        %v1546 = vpop.permute.xlu0 %1545
        %v1548 = vsel %vm1081, %v1544, 0
        %v1551 = vsel %vm1081, %v1546, 0
        %1553 = vmatpush.bf16.xpose.msra.mxu0 0
        %1554 = vmatpush.bf16.xpose.msra.mxu0 0
        %1555 = vmatpush.bf16.xpose.msra.mxu0 0
        %1556 = vmatpush.bf16.xpose.msra.mxu0 0
        %1557 = vmatpush.bf16.xpose.msra.mxu0 0
        %1558 = vmatpush.bf16.xpose.msra.mxu0 0
        %1559 = vmatpush.bf16.xpose.msra.mxu0 0
        %1560 = vmatpush.bf16.xpose.msra.mxu0 %v1551
        %1561 = vmatmul.bf16.gmra.mxu0 %v1548
        %v1562 = vpop.f32.mrf.mxu0
        %v1563 = vadd.f32 %v933, %v1562
        %v1564 = vpop.f32.mrf.mxu0
        %1565 = vdwg.mxu0
        %1566 = vrot.lane.b32.xlu0 %v1314, 112
        %v1567 = vpop.permute.xlu0 %1566
        %1568 = vrot.lane.b32.xlu0 %v1319, 112
        %v1569 = vpop.permute.xlu0 %1568
        %v1571 = vsel %vm1081, %v1567, 0
        %v1574 = vsel %vm1081, %v1569, 0
        %1576 = vmatpush.bf16.xpose.msra.mxu0 0
        %1577 = vmatpush.bf16.xpose.msra.mxu0 0
        %1578 = vmatpush.bf16.xpose.msra.mxu0 0
        %1579 = vmatpush.bf16.xpose.msra.mxu0 0
        %1580 = vmatpush.bf16.xpose.msra.mxu0 0
        %1581 = vmatpush.bf16.xpose.msra.mxu0 0
        %1582 = vmatpush.bf16.xpose.msra.mxu0 0
        %1583 = vmatpush.bf16.xpose.msra.mxu0 %v1574
        %1584 = vmatmul.bf16.gmra.mxu0 %v1571
        %v1585 = vpop.f32.mrf.mxu0
        %v1586 = vadd.f32 %v934, %v1585
        %v1587 = vpop.f32.mrf.mxu0
        %1588 = vdwg.mxu0
        %1589 = vrot.lane.b32.xlu0 %v1343, 112
        %v1590 = vpop.permute.xlu0 %1589
        %1591 = vrot.lane.b32.xlu0 %v1348, 112
        %v1592 = vpop.permute.xlu0 %1591
        %v1594 = vsel %vm1081, %v1590, 0
        %v1597 = vsel %vm1081, %v1592, 0
        %1599 = vmatpush.bf16.xpose.msra.mxu0 0
        %1600 = vmatpush.bf16.xpose.msra.mxu0 0
        %1601 = vmatpush.bf16.xpose.msra.mxu0 0
        %1602 = vmatpush.bf16.xpose.msra.mxu0 0
        %1603 = vmatpush.bf16.xpose.msra.mxu0 0
        %1604 = vmatpush.bf16.xpose.msra.mxu0 0
        %1605 = vmatpush.bf16.xpose.msra.mxu0 0
        %1606 = vmatpush.bf16.xpose.msra.mxu0 %v1597
        %1607 = vmatmul.bf16.gmra.mxu0 %v1594
        %v1608 = vpop.f32.mrf.mxu0
        %v1609 = vadd.f32 %v935, %v1608
        %v1610 = vpop.f32.mrf.mxu0
        %1611 = vdwg.mxu0
        %1612 = vrot.lane.b32.xlu0 %v1372, 112
        %v1613 = vpop.permute.xlu0 %1612
        %1614 = vrot.lane.b32.xlu0 %v1377, 112
        %v1615 = vpop.permute.xlu0 %1614
        %v1617 = vsel %vm1081, %v1613, 0
        %v1620 = vsel %vm1081, %v1615, 0
        %1622 = vmatpush.bf16.xpose.msra.mxu0 0
        %1623 = vmatpush.bf16.xpose.msra.mxu0 0
        %1624 = vmatpush.bf16.xpose.msra.mxu0 0
        %1625 = vmatpush.bf16.xpose.msra.mxu0 0
        %1626 = vmatpush.bf16.xpose.msra.mxu0 0
        %1627 = vmatpush.bf16.xpose.msra.mxu0 0
        %1628 = vmatpush.bf16.xpose.msra.mxu0 0
        %1629 = vmatpush.bf16.xpose.msra.mxu0 %v1620
        %1630 = vmatmul.bf16.gmra.mxu0 %v1617
        %v1631 = vpop.f32.mrf.mxu0
        %v1632 = vadd.f32 %v936, %v1631
        %v1633 = vpop.f32.mrf.mxu0
        %1634 = vdwg.mxu0
        %v1635 = vsel %vm1081, %v1563, -inf
        %1636 = vmax.xlane.f32.xlu0 %v1635
        %v1637 = vpop.xlane.xlu0 %1636
        %v1638 = vsel %vm1081, %v1586, -inf
        %1639 = vmax.xlane.f32.xlu0 %v1638
        %v1640 = vpop.xlane.xlu0 %1639
        %v1641 = vsel %vm1081, %v1609, -inf
        %1642 = vmax.xlane.f32.xlu0 %v1641
        %v1643 = vpop.xlane.xlu0 %1642
        %v1644 = vsel %vm1081, %v1632, -inf
        %1645 = vmax.xlane.f32.xlu0 %v1644
        %v1646 = vpop.xlane.xlu0 %1645
        %v1647 = vsub.f32 %v1563, %v1637
        %v1648 = vsub.f32 %v1586, %v1640
        %v1649 = vsub.f32 %v1609, %v1643
        %v1650 = vsub.f32 %v1632, %v1646
        %v1651 = vmul.f32 %v1647, 1.442695
        %v1652 = vpow.pop %v1651
        %v1653 = vmul.f32 %v1648, 1.442695
        %v1654 = vpow.pop %v1653
        %v1655 = vmul.f32 %v1649, 1.442695
        %v1656 = vpow.pop %v1655
        %v1657 = vmul.f32 %v1650, 1.442695
        %v1658 = vpow.pop %v1657
        %v1659 = vsel %vm1081, %v1652, 0.0
        %1660 = vadd.xlane.f32.xlu0 %v1659
        %v1661 = vpop.xlane.xlu0 %1660
        %v1662 = vsel %vm1081, %v1654, 0.0
        %1663 = vadd.xlane.f32.xlu0 %v1662
        %v1664 = vpop.xlane.xlu0 %1663
        %v1665 = vsel %vm1081, %v1656, 0.0
        %1666 = vadd.xlane.f32.xlu0 %v1665
        %v1667 = vpop.xlane.xlu0 %1666
        %v1668 = vsel %vm1081, %v1658, 0.0
        %1669 = vadd.xlane.f32.xlu0 %v1668
        %v1670 = vpop.xlane.xlu0 %1669
        %v1671 = vrcp.pop %v1661
        %v1672 = vrcp.pop %v1664
        %v1673 = vrcp.pop %v1667
        %v1674 = vrcp.pop %v1670
        %v1675 = vmul.f32 %v1652, %v1671
        %v1676 = vmul.f32 %v1654, %v1672
        %v1677 = vmul.f32 %v1656, %v1673
        %v1678 = vmul.f32 %v1658, %v1674
        %v1679 = vpack.c.bf16 %v1675, %v1675
        %v1680 = vpack.c.bf16 %v1676, %v1676
        %v1681 = vpack.c.bf16 %v1677, %v1677
        %v1682 = vpack.c.bf16 %v1678, %v1678
        %1683 = vrot.lane.b32.xlu0 %v1449, 112
        %v1684 = vpop.permute.xlu0 %1683
        %v1686 = vsel %vm1081, %v1679, 0
        %v1689 = vsel %vm1209, %v1684, 0
        %1691 = vmatpush.bf16.msra.mxu0 0
        %1692 = vmatpush.bf16.msra.mxu0 0
        %1693 = vmatpush.bf16.msra.mxu0 0
        %1694 = vmatpush.bf16.msra.mxu0 0
        %1695 = vmatpush.bf16.msra.mxu0 0
        %1696 = vmatpush.bf16.msra.mxu0 0
        %1697 = vmatpush.bf16.msra.mxu0 0
        %1698 = vmatpush.bf16.msra.mxu0 %v1689
        %1699 = vmatmul.bf16.gmra.mxu0 %v1686
        %v1700 = vpop.f32.mrf.mxu0
        %v1701 = vadd.f32 0.0, %v1700
        %v1702 = vpop.f32.mrf.mxu0
        %1703 = vdwg.mxu0
        %1704 = vrot.lane.b32.xlu0 %v1473, 112
        %v1705 = vpop.permute.xlu0 %1704
        %v1707 = vsel %vm1081, %v1680, 0
        %v1710 = vsel %vm1209, %v1705, 0
        %1712 = vmatpush.bf16.msra.mxu0 0
        %1713 = vmatpush.bf16.msra.mxu0 0
        %1714 = vmatpush.bf16.msra.mxu0 0
        %1715 = vmatpush.bf16.msra.mxu0 0
        %1716 = vmatpush.bf16.msra.mxu0 0
        %1717 = vmatpush.bf16.msra.mxu0 0
        %1718 = vmatpush.bf16.msra.mxu0 0
        %1719 = vmatpush.bf16.msra.mxu0 %v1710
        %1720 = vmatmul.bf16.gmra.mxu0 %v1707
        %v1721 = vpop.f32.mrf.mxu0
        %v1722 = vadd.f32 0.0, %v1721
        %v1723 = vpop.f32.mrf.mxu0
        %1724 = vdwg.mxu0
        %1725 = vrot.lane.b32.xlu0 %v1497, 112
        %v1726 = vpop.permute.xlu0 %1725
        %v1728 = vsel %vm1081, %v1681, 0
        %v1731 = vsel %vm1209, %v1726, 0
        %1733 = vmatpush.bf16.msra.mxu0 0
        %1734 = vmatpush.bf16.msra.mxu0 0
        %1735 = vmatpush.bf16.msra.mxu0 0
        %1736 = vmatpush.bf16.msra.mxu0 0
        %1737 = vmatpush.bf16.msra.mxu0 0
        %1738 = vmatpush.bf16.msra.mxu0 0
        %1739 = vmatpush.bf16.msra.mxu0 0
        %1740 = vmatpush.bf16.msra.mxu0 %v1731
        %1741 = vmatmul.bf16.gmra.mxu0 %v1728
        %v1742 = vpop.f32.mrf.mxu0
        %v1743 = vadd.f32 0.0, %v1742
        %v1744 = vpop.f32.mrf.mxu0
        %1745 = vdwg.mxu0
        %1746 = vrot.lane.b32.xlu0 %v1521, 112
        %v1747 = vpop.permute.xlu0 %1746
        %v1749 = vsel %vm1081, %v1682, 0
        %v1752 = vsel %vm1209, %v1747, 0
        %1754 = vmatpush.bf16.msra.mxu0 0
        %1755 = vmatpush.bf16.msra.mxu0 0
        %1756 = vmatpush.bf16.msra.mxu0 0
        %1757 = vmatpush.bf16.msra.mxu0 0
        %1758 = vmatpush.bf16.msra.mxu0 0
        %1759 = vmatpush.bf16.msra.mxu0 0
        %1760 = vmatpush.bf16.msra.mxu0 0
        %1761 = vmatpush.bf16.msra.mxu0 %v1752
        %1762 = vmatmul.bf16.gmra.mxu0 %v1749
        %v1763 = vpop.f32.mrf.mxu0
        %v1764 = vadd.f32 0.0, %v1763
        %v1765 = vpop.f32.mrf.mxu0
        %1766 = vdwg.mxu0
        %1767 = vrot.lane.b32.xlu0 %v1285, 104
        %v1768 = vpop.permute.xlu0 %1767
        %1769 = vrot.lane.b32.xlu0 %v1290, 104
        %v1770 = vpop.permute.xlu0 %1769
        %v1772 = vsel %vm1081, %v1768, 0
        %v1775 = vsel %vm1081, %v1770, 0
        %1777 = vmatpush.bf16.xpose.msra.mxu0 0
        %1778 = vmatpush.bf16.xpose.msra.mxu0 0
        %1779 = vmatpush.bf16.xpose.msra.mxu0 0
        %1780 = vmatpush.bf16.xpose.msra.mxu0 0
        %1781 = vmatpush.bf16.xpose.msra.mxu0 0
        %1782 = vmatpush.bf16.xpose.msra.mxu0 0
        %1783 = vmatpush.bf16.xpose.msra.mxu0 0
        %1784 = vmatpush.bf16.xpose.msra.mxu0 %v1775
        %1785 = vmatmul.bf16.gmra.mxu0 %v1772
        %v1786 = vpop.f32.mrf.mxu0
        %v1787 = vadd.f32 %v933, %v1786
        %v1788 = vpop.f32.mrf.mxu0
        %1789 = vdwg.mxu0
        %1790 = vrot.lane.b32.xlu0 %v1314, 104
        %v1791 = vpop.permute.xlu0 %1790
        %1792 = vrot.lane.b32.xlu0 %v1319, 104
        %v1793 = vpop.permute.xlu0 %1792
        %v1795 = vsel %vm1081, %v1791, 0
        %v1798 = vsel %vm1081, %v1793, 0
        %1800 = vmatpush.bf16.xpose.msra.mxu0 0
        %1801 = vmatpush.bf16.xpose.msra.mxu0 0
        %1802 = vmatpush.bf16.xpose.msra.mxu0 0
        %1803 = vmatpush.bf16.xpose.msra.mxu0 0
        %1804 = vmatpush.bf16.xpose.msra.mxu0 0
        %1805 = vmatpush.bf16.xpose.msra.mxu0 0
        %1806 = vmatpush.bf16.xpose.msra.mxu0 0
        %1807 = vmatpush.bf16.xpose.msra.mxu0 %v1798
        %1808 = vmatmul.bf16.gmra.mxu0 %v1795
        %v1809 = vpop.f32.mrf.mxu0
        %v1810 = vadd.f32 %v934, %v1809
        %v1811 = vpop.f32.mrf.mxu0
        %1812 = vdwg.mxu0
        %1813 = vrot.lane.b32.xlu0 %v1343, 104
        %v1814 = vpop.permute.xlu0 %1813
        %1815 = vrot.lane.b32.xlu0 %v1348, 104
        %v1816 = vpop.permute.xlu0 %1815
        %v1818 = vsel %vm1081, %v1814, 0
        %v1821 = vsel %vm1081, %v1816, 0
        %1823 = vmatpush.bf16.xpose.msra.mxu0 0
        %1824 = vmatpush.bf16.xpose.msra.mxu0 0
        %1825 = vmatpush.bf16.xpose.msra.mxu0 0
        %1826 = vmatpush.bf16.xpose.msra.mxu0 0
        %1827 = vmatpush.bf16.xpose.msra.mxu0 0
        %1828 = vmatpush.bf16.xpose.msra.mxu0 0
        %1829 = vmatpush.bf16.xpose.msra.mxu0 0
        %1830 = vmatpush.bf16.xpose.msra.mxu0 %v1821
        %1831 = vmatmul.bf16.gmra.mxu0 %v1818
        %v1832 = vpop.f32.mrf.mxu0
        %v1833 = vadd.f32 %v935, %v1832
        %v1834 = vpop.f32.mrf.mxu0
        %1835 = vdwg.mxu0
        %1836 = vrot.lane.b32.xlu0 %v1372, 104
        %v1837 = vpop.permute.xlu0 %1836
        %1838 = vrot.lane.b32.xlu0 %v1377, 104
        %v1839 = vpop.permute.xlu0 %1838
        %v1841 = vsel %vm1081, %v1837, 0
        %v1844 = vsel %vm1081, %v1839, 0
        %1846 = vmatpush.bf16.xpose.msra.mxu0 0
        %1847 = vmatpush.bf16.xpose.msra.mxu0 0
        %1848 = vmatpush.bf16.xpose.msra.mxu0 0
        %1849 = vmatpush.bf16.xpose.msra.mxu0 0
        %1850 = vmatpush.bf16.xpose.msra.mxu0 0
        %1851 = vmatpush.bf16.xpose.msra.mxu0 0
        %1852 = vmatpush.bf16.xpose.msra.mxu0 0
        %1853 = vmatpush.bf16.xpose.msra.mxu0 %v1844
        %1854 = vmatmul.bf16.gmra.mxu0 %v1841
        %v1855 = vpop.f32.mrf.mxu0
        %v1856 = vadd.f32 %v936, %v1855
        %v1857 = vpop.f32.mrf.mxu0
        %1858 = vdwg.mxu0
        %v1859 = vsel %vm1081, %v1787, -inf
        %1860 = vmax.xlane.f32.xlu0 %v1859
        %v1861 = vpop.xlane.xlu0 %1860
        %v1862 = vsel %vm1081, %v1810, -inf
        %1863 = vmax.xlane.f32.xlu0 %v1862
        %v1864 = vpop.xlane.xlu0 %1863
        %v1865 = vsel %vm1081, %v1833, -inf
        %1866 = vmax.xlane.f32.xlu0 %v1865
        %v1867 = vpop.xlane.xlu0 %1866
        %v1868 = vsel %vm1081, %v1856, -inf
        %1869 = vmax.xlane.f32.xlu0 %v1868
        %v1870 = vpop.xlane.xlu0 %1869
        %v1871 = vsub.f32 %v1787, %v1861
        %v1872 = vsub.f32 %v1810, %v1864
        %v1873 = vsub.f32 %v1833, %v1867
        %v1874 = vsub.f32 %v1856, %v1870
        %v1875 = vmul.f32 %v1871, 1.442695
        %v1876 = vpow.pop %v1875
        %v1877 = vmul.f32 %v1872, 1.442695
        %v1878 = vpow.pop %v1877
        %v1879 = vmul.f32 %v1873, 1.442695
        %v1880 = vpow.pop %v1879
        %v1881 = vmul.f32 %v1874, 1.442695
        %v1882 = vpow.pop %v1881
        %v1883 = vsel %vm1081, %v1876, 0.0
        %1884 = vadd.xlane.f32.xlu0 %v1883
        %v1885 = vpop.xlane.xlu0 %1884
        %v1886 = vsel %vm1081, %v1878, 0.0
        %1887 = vadd.xlane.f32.xlu0 %v1886
        %v1888 = vpop.xlane.xlu0 %1887
        %v1889 = vsel %vm1081, %v1880, 0.0
        %1890 = vadd.xlane.f32.xlu0 %v1889
        %v1891 = vpop.xlane.xlu0 %1890
        %v1892 = vsel %vm1081, %v1882, 0.0
        %1893 = vadd.xlane.f32.xlu0 %v1892
        %v1894 = vpop.xlane.xlu0 %1893
        %v1895 = vrcp.pop %v1885
        %v1896 = vrcp.pop %v1888
        %v1897 = vrcp.pop %v1891
        %v1898 = vrcp.pop %v1894
        %v1899 = vmul.f32 %v1876, %v1895
        %v1900 = vmul.f32 %v1878, %v1896
        %v1901 = vmul.f32 %v1880, %v1897
        %v1902 = vmul.f32 %v1882, %v1898
        %v1903 = vpack.c.bf16 %v1899, %v1899
        %v1904 = vpack.c.bf16 %v1900, %v1900
        %v1905 = vpack.c.bf16 %v1901, %v1901
        %v1906 = vpack.c.bf16 %v1902, %v1902
        %1907 = vrot.lane.b32.xlu0 %v1449, 104
        %v1908 = vpop.permute.xlu0 %1907
        %v1910 = vsel %vm1081, %v1903, 0
        %v1913 = vsel %vm1209, %v1908, 0
        %1915 = vmatpush.bf16.msra.mxu0 0
        %1916 = vmatpush.bf16.msra.mxu0 0
        %1917 = vmatpush.bf16.msra.mxu0 0
        %1918 = vmatpush.bf16.msra.mxu0 0
        %1919 = vmatpush.bf16.msra.mxu0 0
        %1920 = vmatpush.bf16.msra.mxu0 0
        %1921 = vmatpush.bf16.msra.mxu0 0
        %1922 = vmatpush.bf16.msra.mxu0 %v1913
        %1923 = vmatmul.bf16.gmra.mxu0 %v1910
        %v1924 = vpop.f32.mrf.mxu0
        %v1925 = vadd.f32 0.0, %v1924
        %v1926 = vpop.f32.mrf.mxu0
        %1927 = vdwg.mxu0
        %1928 = vrot.lane.b32.xlu0 %v1473, 104
        %v1929 = vpop.permute.xlu0 %1928
        %v1931 = vsel %vm1081, %v1904, 0
        %v1934 = vsel %vm1209, %v1929, 0
        %1936 = vmatpush.bf16.msra.mxu0 0
        %1937 = vmatpush.bf16.msra.mxu0 0
        %1938 = vmatpush.bf16.msra.mxu0 0
        %1939 = vmatpush.bf16.msra.mxu0 0
        %1940 = vmatpush.bf16.msra.mxu0 0
        %1941 = vmatpush.bf16.msra.mxu0 0
        %1942 = vmatpush.bf16.msra.mxu0 0
        %1943 = vmatpush.bf16.msra.mxu0 %v1934
        %1944 = vmatmul.bf16.gmra.mxu0 %v1931
        %v1945 = vpop.f32.mrf.mxu0
        %v1946 = vadd.f32 0.0, %v1945
        %v1947 = vpop.f32.mrf.mxu0
        %1948 = vdwg.mxu0
        %1949 = vrot.lane.b32.xlu0 %v1497, 104
        %v1950 = vpop.permute.xlu0 %1949
        %v1952 = vsel %vm1081, %v1905, 0
        %v1955 = vsel %vm1209, %v1950, 0
        %1957 = vmatpush.bf16.msra.mxu0 0
        %1958 = vmatpush.bf16.msra.mxu0 0
        %1959 = vmatpush.bf16.msra.mxu0 0
        %1960 = vmatpush.bf16.msra.mxu0 0
        %1961 = vmatpush.bf16.msra.mxu0 0
        %1962 = vmatpush.bf16.msra.mxu0 0
        %1963 = vmatpush.bf16.msra.mxu0 0
        %1964 = vmatpush.bf16.msra.mxu0 %v1955
        %1965 = vmatmul.bf16.gmra.mxu0 %v1952
        %v1966 = vpop.f32.mrf.mxu0
        %v1967 = vadd.f32 0.0, %v1966
        %v1968 = vpop.f32.mrf.mxu0
        %1969 = vdwg.mxu0
        %1970 = vrot.lane.b32.xlu0 %v1521, 104
        %v1971 = vpop.permute.xlu0 %1970
        %v1973 = vsel %vm1081, %v1906, 0
        %v1976 = vsel %vm1209, %v1971, 0
        %1978 = vmatpush.bf16.msra.mxu0 0
        %1979 = vmatpush.bf16.msra.mxu0 0
        %1980 = vmatpush.bf16.msra.mxu0 0
        %1981 = vmatpush.bf16.msra.mxu0 0
        %1982 = vmatpush.bf16.msra.mxu0 0
        %1983 = vmatpush.bf16.msra.mxu0 0
        %1984 = vmatpush.bf16.msra.mxu0 0
        %1985 = vmatpush.bf16.msra.mxu0 %v1976
        %1986 = vmatmul.bf16.gmra.mxu0 %v1973
        %v1987 = vpop.f32.mrf.mxu0
        %v1988 = vadd.f32 0.0, %v1987
        %v1989 = vpop.f32.mrf.mxu0
        %1990 = vdwg.mxu0
        %1995 = vrot.lane.b32.xlu0 %v1468, 8
        %v1996 = vpop.permute.xlu0 %1995
        %1997 = vrot.lane.b32.xlu0 %v1492, 8
        %v1998 = vpop.permute.xlu0 %1997
        %1999 = vrot.lane.b32.xlu0 %v1516, 8
        %v2000 = vpop.permute.xlu0 %1999
        %2001 = vrot.lane.b32.xlu0 %v1540, 8
        %v2002 = vpop.permute.xlu0 %2001
        %2011 = vrot.lane.b32.xlu0 %v1701, 16
        %v2012 = vpop.permute.xlu0 %2011
        %2013 = vrot.lane.b32.xlu0 %v1722, 16
        %v2014 = vpop.permute.xlu0 %2013
        %2015 = vrot.lane.b32.xlu0 %v1743, 16
        %v2016 = vpop.permute.xlu0 %2015
        %2017 = vrot.lane.b32.xlu0 %v1764, 16
        %v2018 = vpop.permute.xlu0 %2017
        %2027 = vrot.lane.b32.xlu0 %v1925, 24
        %v2028 = vpop.permute.xlu0 %2027
        %2029 = vrot.lane.b32.xlu0 %v1946, 24
        %v2030 = vpop.permute.xlu0 %2029
        %2031 = vrot.lane.b32.xlu0 %v1967, 24
        %v2032 = vpop.permute.xlu0 %2031
        %2033 = vrot.lane.b32.xlu0 %v1988, 24
        %v2034 = vpop.permute.xlu0 %2033
        %v2039 = vsel %vm1081, %v1223, %v1996
        %v2040 = vsel %vm1081, %v1242, %v1998
        %v2041 = vsel %vm1081, %v1261, %v2000
        %v2042 = vsel %vm1081, %v1280, %v2002
        %vm2043 = vcmask 130048
        %v2044 = vsel %vm2043, %v2039, %v2012
        %v2045 = vsel %vm2043, %v2040, %v2014
        %v2046 = vsel %vm2043, %v2041, %v2016
        %v2047 = vsel %vm2043, %v2042, %v2018
        %vm2048 = vcmask 195584
        %v2049 = vsel %vm2048, %v2044, %v2028
        %v2050 = vsel %vm2048, %v2045, %v2030
        %v2051 = vsel %vm2048, %v2046, %v2032
        %v2052 = vsel %vm2048, %v2047, %v2034
        %v2053 = vpack.c.bf16 %v2050, %v2049
        %v2054 = vpack.c.bf16 %v2052, %v2051
        %v2055 = vld [vmem:[%s875] sm:$0xf]
        %v2056 = vld [vmem:[%s875 + $0x4] sm:$0xf]
        %v2057 = vld [vmem:[%s875 + $0x8] sm:$0xf]
        %v2058 = vld [vmem:[%s875 + $0xc] sm:$0xf]
        %v2059 = vld [vmem:[%s878] sm:$0x1]
        %v2061 = vperm.slane %v2059, 0
        %v2067 = vunpack.c.l.b16 %v2055
        %v2068 = vunpack.c.l.b16 %v2056
        %v2069 = vunpack.c.l.b16 %v2057
        %v2070 = vunpack.c.l.b16 %v2058
        %v2071 = vpack.c.b16 %v2068, %v2067
        %v2072 = vpack.c.b16 %v2070, %v2069
        %v2076 = vsel %vm961, %v2053, 0
        %v2079 = vsel %vm961, %v2054, 0
        %2081 = vmatpush.bf16.msra.mxu0 0
        %2082 = vmatpush.bf16.msra.mxu0 0
        %2083 = vmatpush.bf16.msra.mxu0 0
        %2084 = vmatpush.bf16.msra.mxu0 0
        %2085 = vmatpush.bf16.msra.mxu0 0
        %2086 = vmatpush.bf16.msra.mxu0 0
        %2087 = vmatpush.bf16.msra.mxu0 %v2072
        %2088 = vmatpush.bf16.msra.mxu0 %v2071
        %2089 = vmatmul.bf16.gmra.mxu0 %v2076
        %v2090 = vpop.f32.mrf.mxu0
        %v2091 = vadd.f32 %v2061, %v2090
        %v2092 = vpop.f32.mrf.mxu0
        %v2093 = vadd.f32 %v2061, %v2092
        %2094 = vmatmul.bf16.gmra.mxu0 %v2079
        %v2095 = vpop.f32.mrf.mxu0
        %v2096 = vadd.f32 %v2061, %v2095
        %v2097 = vpop.f32.mrf.mxu0
        %v2098 = vadd.f32 %v2061, %v2097
        %2099 = vdwg.mxu0
        %v2100 = vadd.f32 %v922, %v2091
        %v2101 = vadd.f32 %v923, %v2093
        %v2102 = vadd.f32 %v924, %v2096
        %v2103 = vadd.f32 %v925, %v2098
        %v2104 = vld [vmem:[%s881] sm:$0x1]
        %v2105 = vld [vmem:[%s884] sm:$0x1]
        %v2106 = vsel %vm961, %v2100, 0.0
        %2107 = vadd.xlane.f32.xlu0 %v2106
        %v2108 = vpop.xlane.xlu0 %2107
        %v2109 = vsel %vm961, %v2101, 0.0
        %2110 = vadd.xlane.f32.xlu0 %v2109
        %v2111 = vpop.xlane.xlu0 %2110
        %v2112 = vsel %vm961, %v2102, 0.0
        %2113 = vadd.xlane.f32.xlu0 %v2112
        %v2114 = vpop.xlane.xlu0 %2113
        %v2115 = vsel %vm961, %v2103, 0.0
        %2116 = vadd.xlane.f32.xlu0 %v2115
        %v2117 = vpop.xlane.xlu0 %2116
        %v2118 = vrcp.pop 32.0
        %v2119 = vmul.f32 32.0, %v2118
        %v2120 = vsub.f32 1.0, %v2119
        %v2121 = vmul.f32 %v2118, %v2120
        %v2122 = vadd.f32 %v2118, %v2121
        %vm2123 = vweird.f32 %v2118
        %v2124 = vsel %vm2123, %v2118, %v2122
        %v2125 = vmul.f32 %v2108, %v2124
        %v2126 = vmul.f32 %v2111, %v2124
        %v2127 = vmul.f32 %v2114, %v2124
        %v2128 = vmul.f32 %v2117, %v2124
        %v2129 = vsub.f32 %v2100, %v2125
        %v2130 = vsub.f32 %v2101, %v2126
        %v2131 = vsub.f32 %v2102, %v2127
        %v2132 = vsub.f32 %v2103, %v2128
        %v2133 = vmul.f32 %v2129, %v2129
        %v2134 = vmul.f32 %v2130, %v2130
        %v2135 = vmul.f32 %v2131, %v2131
        %v2136 = vmul.f32 %v2132, %v2132
        %v2137 = vsel %vm961, %v2133, 0.0
        %2138 = vadd.xlane.f32.xlu0 %v2137
        %v2139 = vpop.xlane.xlu0 %2138
        %v2140 = vsel %vm961, %v2134, 0.0
        %2141 = vadd.xlane.f32.xlu0 %v2140
        %v2142 = vpop.xlane.xlu0 %2141
        %v2143 = vsel %vm961, %v2135, 0.0
        %2144 = vadd.xlane.f32.xlu0 %v2143
        %v2145 = vpop.xlane.xlu0 %2144
        %v2146 = vsel %vm961, %v2136, 0.0
        %2147 = vadd.xlane.f32.xlu0 %v2146
        %v2148 = vpop.xlane.xlu0 %2147
        %v2149 = vmul.f32 %v2139, %v2124
        %v2150 = vmul.f32 %v2142, %v2124
        %v2151 = vmul.f32 %v2145, %v2124
        %v2152 = vmul.f32 %v2148, %v2124
        %v2153 = vadd.f32 %v2149, 1e-05
        %v2154 = vadd.f32 %v2150, 1e-05
        %v2155 = vadd.f32 %v2151, 1e-05
        %v2156 = vadd.f32 %v2152, 1e-05
        %v2157 = vrsqrt.pop %v2153
        %v2158 = vmul.f32 %v2157, %v2153
        %v2159 = vmul.f32 %v2158, %v2157
        %v2160 = vmul.f32 0.5, %v2159
        %v2161 = vsub.f32 1.5, %v2160
        %v2162 = vmul.f32 %v2157, %v2161
        %vm2163 = vweird.f32 %v2153
        %vm2164 = vweird.f32 %v2157
        %vm2165 = vmor %vm2163, %vm2164
        %v2166 = vsel %vm2165, %v2157, %v2162
        %v2167 = vrsqrt.pop %v2154
        %v2168 = vmul.f32 %v2167, %v2154
        %v2169 = vmul.f32 %v2168, %v2167
        %v2170 = vmul.f32 0.5, %v2169
        %v2171 = vsub.f32 1.5, %v2170
        %v2172 = vmul.f32 %v2167, %v2171
        %vm2173 = vweird.f32 %v2154
        %vm2174 = vweird.f32 %v2167
        %vm2175 = vmor %vm2173, %vm2174
        %v2176 = vsel %vm2175, %v2167, %v2172
        %v2177 = vrsqrt.pop %v2155
        %v2178 = vmul.f32 %v2177, %v2155
        %v2179 = vmul.f32 %v2178, %v2177
        %v2180 = vmul.f32 0.5, %v2179
        %v2181 = vsub.f32 1.5, %v2180
        %v2182 = vmul.f32 %v2177, %v2181
        %vm2183 = vweird.f32 %v2155
        %vm2184 = vweird.f32 %v2177
        %vm2185 = vmor %vm2183, %vm2184
        %v2186 = vsel %vm2185, %v2177, %v2182
        %v2187 = vrsqrt.pop %v2156
        %v2188 = vmul.f32 %v2187, %v2156
        %v2189 = vmul.f32 %v2188, %v2187
        %v2190 = vmul.f32 0.5, %v2189
        %v2191 = vsub.f32 1.5, %v2190
        %v2192 = vmul.f32 %v2187, %v2191
        %vm2193 = vweird.f32 %v2156
        %vm2194 = vweird.f32 %v2187
        %vm2195 = vmor %vm2193, %vm2194
        %v2196 = vsel %vm2195, %v2187, %v2192
        %v2197 = vmul.f32 %v2129, %v2166
        %v2198 = vmul.f32 %v2130, %v2176
        %v2199 = vmul.f32 %v2131, %v2186
        %v2200 = vmul.f32 %v2132, %v2196
        %v2202 = vperm.slane %v2104, 0
        %v2204 = vmul.f32 %v2197, %v2202
        %v2205 = vmul.f32 %v2198, %v2202
        %v2206 = vmul.f32 %v2199, %v2202
        %v2207 = vmul.f32 %v2200, %v2202
        %v2209 = vperm.slane %v2105, 0
        %v2211 = vadd.f32 %v2204, %v2209
        %v2212 = vadd.f32 %v2205, %v2209
        %v2213 = vadd.f32 %v2206, %v2209
        %v2214 = vadd.f32 %v2207, %v2209
        %v2215 = vpack.c.bf16 %v2212, %v2211
        %v2216 = vpack.c.bf16 %v2214, %v2213
        %v2217 = vld [vmem:[%s895] sm:$0xf]
        %v2218 = vld [vmem:[%s895 + $0x4] sm:$0xf]
        %v2219 = vld [vmem:[%s895 + $0x8] sm:$0xf]
        %v2220 = vld [vmem:[%s895 + $0xc] sm:$0xf]
        %v2221 = vld [vmem:[%s898] sm:$0x1]
        %v2223 = vperm.slane %v2221, 0
        %v2229 = vunpack.c.l.b16 %v2217
        %v2230 = vunpack.c.l.b16 %v2218
        %v2231 = vunpack.c.l.b16 %v2219
        %v2232 = vunpack.c.l.b16 %v2220
        %v2233 = vpack.c.b16 %v2230, %v2229
        %v2234 = vpack.c.b16 %v2232, %v2231
        %v2238 = vsel %vm961, %v2215, 0
        %v2241 = vsel %vm961, %v2216, 0
        %2243 = vmatpush.bf16.msra.mxu0 0
        %2244 = vmatpush.bf16.msra.mxu0 0
        %2245 = vmatpush.bf16.msra.mxu0 0
        %2246 = vmatpush.bf16.msra.mxu0 0
        %2247 = vmatpush.bf16.msra.mxu0 0
        %2248 = vmatpush.bf16.msra.mxu0 0
        %2249 = vmatpush.bf16.msra.mxu0 %v2234
        %2250 = vmatpush.bf16.msra.mxu0 %v2233
        %2251 = vmatmul.bf16.gmra.mxu0 %v2238
        %v2252 = vpop.f32.mrf.mxu0
        %v2253 = vadd.f32 %v2223, %v2252
        %v2254 = vpop.f32.mrf.mxu0
        %v2255 = vadd.f32 %v2223, %v2254
        %2256 = vmatmul.bf16.gmra.mxu0 %v2241
        %v2257 = vpop.f32.mrf.mxu0
        %v2258 = vadd.f32 %v2223, %v2257
        %v2259 = vpop.f32.mrf.mxu0
        %v2260 = vadd.f32 %v2223, %v2259
        %2261 = vdwg.mxu0
        %v2262 = vmax.f32 %v2253, 0.0
        %v2263 = vmax.f32 %v2255, 0.0
        %v2264 = vmax.f32 %v2258, 0.0
        %v2265 = vmax.f32 %v2260, 0.0
        %v2266 = vpack.c.bf16 %v2263, %v2262
        %v2267 = vpack.c.bf16 %v2265, %v2264
        %v2268 = vld [vmem:[%s903] sm:$0xf]
        %v2269 = vld [vmem:[%s903 + $0x4] sm:$0xf]
        %v2270 = vld [vmem:[%s903 + $0x8] sm:$0xf]
        %v2271 = vld [vmem:[%s903 + $0xc] sm:$0xf]
        %v2272 = vld [vmem:[%s903 + $0x10] sm:$0xf]
        %v2273 = vld [vmem:[%s903 + $0x14] sm:$0xf]
        %v2274 = vld [vmem:[%s903 + $0x18] sm:$0xf]
        %v2275 = vld [vmem:[%s903 + $0x1c] sm:$0xf]
        %v2276 = vld [vmem:[%s906] sm:$0x1]
        %v2278 = vperm.slane %v2276, 0
        %v2288 = vunpack.c.l.b16 %v2268
        %v2289 = vunpack.c.l.b16 %v2269
        %v2290 = vunpack.c.l.b16 %v2270
        %v2291 = vunpack.c.l.b16 %v2271
        %v2292 = vunpack.c.l.b16 %v2272
        %v2293 = vunpack.c.l.b16 %v2273
        %v2294 = vunpack.c.l.b16 %v2274
        %v2295 = vunpack.c.l.b16 %v2275
        %v2296 = vpack.c.b16 %v2289, %v2288
        %v2297 = vpack.c.b16 %v2291, %v2290
        %v2298 = vpack.c.b16 %v2293, %v2292
        %v2299 = vpack.c.b16 %v2295, %v2294
        %vm2304 = vcmask 523264
        %v2306 = vsel %vm2304, %v2266, 0
        %v2309 = vsel %vm2304, %v2267, 0
        %2311 = vmatpush.bf16.msra.mxu0 0
        %2312 = vmatpush.bf16.msra.mxu0 0
        %2313 = vmatpush.bf16.msra.mxu0 0
        %2314 = vmatpush.bf16.msra.mxu0 0
        %2315 = vmatpush.bf16.msra.mxu0 %v2299
        %2316 = vmatpush.bf16.msra.mxu0 %v2298
        %2317 = vmatpush.bf16.msra.mxu0 %v2297
        %2318 = vmatpush.bf16.msra.mxu0 %v2296
        %2319 = vmatmul.bf16.gmra.mxu0 %v2306
        %v2320 = vpop.f32.mrf.mxu0
        %v2321 = vadd.f32 %v2278, %v2320
        %v2322 = vpop.f32.mrf.mxu0
        %v2323 = vadd.f32 %v2278, %v2322
        %2324 = vmatmul.bf16.gmra.mxu0 %v2309
        %v2325 = vpop.f32.mrf.mxu0
        %v2326 = vadd.f32 %v2278, %v2325
        %v2327 = vpop.f32.mrf.mxu0
        %v2328 = vadd.f32 %v2278, %v2327
        %2329 = vdwg.mxu0
        %v2330 = vadd.f32 %v2211, %v2321
        %v2331 = vadd.f32 %v2212, %v2323
        %v2332 = vadd.f32 %v2213, %v2326
        %v2333 = vadd.f32 %v2214, %v2328
        %v2334 = vld [vmem:[%s887] sm:$0x1]
        %v2335 = vld [vmem:[%s890] sm:$0x1]
        %v2336 = vsel %vm961, %v2330, 0.0
        %2337 = vadd.xlane.f32.xlu0 %v2336
        %v2338 = vpop.xlane.xlu0 %2337
        %v2339 = vsel %vm961, %v2331, 0.0
        %2340 = vadd.xlane.f32.xlu0 %v2339
        %v2341 = vpop.xlane.xlu0 %2340
        %v2342 = vsel %vm961, %v2332, 0.0
        %2343 = vadd.xlane.f32.xlu0 %v2342
        %v2344 = vpop.xlane.xlu0 %2343
        %v2345 = vsel %vm961, %v2333, 0.0
        %2346 = vadd.xlane.f32.xlu0 %v2345
        %v2347 = vpop.xlane.xlu0 %2346
        %v2348 = vmul.f32 %v2338, %v2124
        %v2349 = vmul.f32 %v2341, %v2124
        %v2350 = vmul.f32 %v2344, %v2124
        %v2351 = vmul.f32 %v2347, %v2124
        %v2352 = vsub.f32 %v2330, %v2348
        %v2353 = vsub.f32 %v2331, %v2349
        %v2354 = vsub.f32 %v2332, %v2350
        %v2355 = vsub.f32 %v2333, %v2351
        %v2356 = vmul.f32 %v2352, %v2352
        %v2357 = vmul.f32 %v2353, %v2353
        %v2358 = vmul.f32 %v2354, %v2354
        %v2359 = vmul.f32 %v2355, %v2355
        %v2360 = vsel %vm961, %v2356, 0.0
        %2361 = vadd.xlane.f32.xlu0 %v2360
        %v2362 = vpop.xlane.xlu0 %2361
        %v2363 = vsel %vm961, %v2357, 0.0
        %2364 = vadd.xlane.f32.xlu0 %v2363
        %v2365 = vpop.xlane.xlu0 %2364
        %v2366 = vsel %vm961, %v2358, 0.0
        %2367 = vadd.xlane.f32.xlu0 %v2366
        %v2368 = vpop.xlane.xlu0 %2367
        %v2369 = vsel %vm961, %v2359, 0.0
        %2370 = vadd.xlane.f32.xlu0 %v2369
        %v2371 = vpop.xlane.xlu0 %2370
        %v2372 = vmul.f32 %v2362, %v2124
        %v2373 = vmul.f32 %v2365, %v2124
        %v2374 = vmul.f32 %v2368, %v2124
        %v2375 = vmul.f32 %v2371, %v2124
        %v2376 = vadd.f32 %v2372, 1e-05
        %v2377 = vadd.f32 %v2373, 1e-05
        %v2378 = vadd.f32 %v2374, 1e-05
        %v2379 = vadd.f32 %v2375, 1e-05
        %v2380 = vrsqrt.pop %v2376
        %v2381 = vmul.f32 %v2380, %v2376
        %v2382 = vmul.f32 %v2381, %v2380
        %v2383 = vmul.f32 0.5, %v2382
        %v2384 = vsub.f32 1.5, %v2383
        %v2385 = vmul.f32 %v2380, %v2384
        %vm2386 = vweird.f32 %v2376
        %vm2387 = vweird.f32 %v2380
        %vm2388 = vmor %vm2386, %vm2387
        %v2389 = vsel %vm2388, %v2380, %v2385
        %v2390 = vrsqrt.pop %v2377
        %v2391 = vmul.f32 %v2390, %v2377
        %v2392 = vmul.f32 %v2391, %v2390
        %v2393 = vmul.f32 0.5, %v2392
        %v2394 = vsub.f32 1.5, %v2393
        %v2395 = vmul.f32 %v2390, %v2394
        %vm2396 = vweird.f32 %v2377
        %vm2397 = vweird.f32 %v2390
        %vm2398 = vmor %vm2396, %vm2397
        %v2399 = vsel %vm2398, %v2390, %v2395
        %v2400 = vrsqrt.pop %v2378
        %v2401 = vmul.f32 %v2400, %v2378
        %v2402 = vmul.f32 %v2401, %v2400
        %v2403 = vmul.f32 0.5, %v2402
        %v2404 = vsub.f32 1.5, %v2403
        %v2405 = vmul.f32 %v2400, %v2404
        %vm2406 = vweird.f32 %v2378
        %vm2407 = vweird.f32 %v2400
        %vm2408 = vmor %vm2406, %vm2407
        %v2409 = vsel %vm2408, %v2400, %v2405
        %v2410 = vrsqrt.pop %v2379
        %v2411 = vmul.f32 %v2410, %v2379
        %v2412 = vmul.f32 %v2411, %v2410
        %v2413 = vmul.f32 0.5, %v2412
        %v2414 = vsub.f32 1.5, %v2413
        %v2415 = vmul.f32 %v2410, %v2414
        %vm2416 = vweird.f32 %v2379
        %vm2417 = vweird.f32 %v2410
        %vm2418 = vmor %vm2416, %vm2417
        %v2419 = vsel %vm2418, %v2410, %v2415
        %v2420 = vmul.f32 %v2352, %v2389
        %v2421 = vmul.f32 %v2353, %v2399
        %v2422 = vmul.f32 %v2354, %v2409
        %v2423 = vmul.f32 %v2355, %v2419
        %v2425 = vperm.slane %v2334, 0
        %v2427 = vmul.f32 %v2420, %v2425
        %v2428 = vmul.f32 %v2421, %v2425
        %v2429 = vmul.f32 %v2422, %v2425
        %v2430 = vmul.f32 %v2423, %v2425
        %v2432 = vperm.slane %v2335, 0
        %v2434 = vadd.f32 %v2427, %v2432
        %v2435 = vadd.f32 %v2428, %v2432
        %v2436 = vadd.f32 %v2429, %v2432
        %v2437 = vadd.f32 %v2430, %v2432
        %2438 = vst.msk [vmem:[#allocation2] sm:$0xff] %vm961, %v2434
        %2439 = vst.msk [vmem:[#allocation2 + $0x8] sm:$0xff] %vm961, %v2435
        %2440 = vst.msk [vmem:[#allocation2 + $0x10] sm:$0xff] %vm961, %v2436
        %2441 = vst.msk [vmem:[#allocation2 + $0x18] sm:$0xff] %vm961, %v2437
        %p2442 = scmp.eq.s32.totalorder %s36, 1
        // Predicated region
        $region101: #{seq_forward.1} parent=95 // pred_check
          %p2443 = pneg %p2442
        $region102: #{seq_forward.1} parent=95 // pred_check_branch
          %2445 = sbr.rel (%p2443) target = $region104
        $region103: #{seq_forward.1} parent=95 // pred_region
          %v2446 = vld [vmem:[%s845] sm:$0xff]
          %v2447 = vld [vmem:[%s845 + $0x8] sm:$0xff]
          %v2448 = vld [vmem:[%s845 + $0x10] sm:$0xff]
          %v2449 = vld [vmem:[%s845 + $0x18] sm:$0xff]
          %2451 = vset.pattern.permute.xlu0 0
          %2452 = vperm.xlu0 %2451, %v2446
          %v2453 = vpop.permute.xlu0 %2452
          %2456 = vset.pattern.permute.xlu0 0
          %2457 = vperm.xlu0 %2456, %v2447
          %v2458 = vpop.permute.xlu0 %2457
          %2461 = vset.pattern.permute.xlu0 0
          %2462 = vperm.xlu0 %2461, %v2448
          %v2463 = vpop.permute.xlu0 %2462
          %2466 = vset.pattern.permute.xlu0 0
          %2467 = vperm.xlu0 %2466, %v2449
          %v2468 = vpop.permute.xlu0 %2467
          %v2470 = vmul.f32 %v2434, %v2453
          %v2471 = vmul.f32 %v2435, %v2458
          %v2472 = vmul.f32 %v2436, %v2463
          %v2473 = vmul.f32 %v2437, %v2468
          %2474 = vst.msk [vmem:[#allocation3] sm:$0xff] %vm961, %v2470
          %2475 = vst.msk [vmem:[#allocation3 + $0x8] sm:$0xff] %vm961, %v2471
          %2476 = vst.msk [vmem:[#allocation3 + $0x10] sm:$0xff] %vm961, %v2472
          %2477 = vst.msk [vmem:[#allocation3 + $0x18] sm:$0xff] %vm961, %v2473
        $region104: #{seq_forward.1} parent=95 // pred_fallthru
          _
        // Predicated region
        $region105: #{seq_forward.1} parent=95 // pred_check
          %p2478 = pneg %p555
        $region106: #{seq_forward.1} parent=95 // pred_check_branch
          %2480 = sbr.rel (%p2478) target = $region108
        $region107: #{seq_forward.1} parent=95 // pred_region
          %s2481 = smul.u32 4, %s35
          %2483 = vsyncadd [#allocation4], 0
          %s2484 = smul.addr %s2481, 8
          %s2485 = scalar_lea.hbm %s19, %s2484
          %s2486 = sshll.u32 [#allocation3], 4
          %s2487 = int_to_ptr.vmem [resolvable:$true] %s2486
          %s2488 = sshll.u32 %s2485, 4
          %s2489 = int_to_ptr.hbm [resolvable:$true] %s2488
          %2494 = dma.vmem_to_hbm [thread:$0]  %s2487, 512, %s2489, [#allocation4], 128, 128, 8
        $region108: #{seq_forward.1} parent=95 // pred_fallthru
          _
        // Predicated region
        $region109: #{seq_forward.1} parent=95 // pred_check
          %p2495 = pneg %p555
        $region110: #{seq_forward.1} parent=95 // pred_check_branch
          %2497 = sbr.rel (%p2495) target = $region112
        $region111: #{seq_forward.1} parent=95 // pred_region
          %2499 = dma.done [#allocation4], 512
        $region112: #{seq_forward.1} parent=95 // pred_fallthru
          _
      $region96: #{seq_forward.1} parent=5 // pred_fallthru
        _
      %p2500 = scmp.le.s32.totalorder 2, %s26
      // Predicated region
      $region113: #{seq_forward.1} parent=5 // pred_check
        %p2501 = pneg %p2500
      $region114: #{seq_forward.1} parent=5 // pred_check_branch
        %2503 = sbr.rel (%p2501) target = $region116
      $region115: #{seq_forward.1} parent=5 // pred_region
        %s2504 = ssub.s32 %s26, 2
      $region116: #{seq_forward.1} parent=5 // pred_fallthru
        _
    $region6: #{seq_forward.1} parent=1 // loop_footer
      %s30 = sadd.s32 1, %s26
    $region7: #{seq_forward.1} parent=1 // loop_footer_branch
      %25 = sbr.rel target = $region3
    $region8: #{seq_forward.1} parent=1 // loop_exit
      _
    %2505 = vsyncpa [#allocation4], 1
    %s2506 = scalar_lea.sflag [#allocation4], 1
    %2507 = vsyncpa %s2506, 1

</llo_original>
